<compile_context>
chip_gen: v5e
topology: v5e:2x2
jax: 0.10.0
libtpu: 0.0.40
codegen_flags: <defaults>
</compile_context>

<pallas_src>
import functools

import jax
import jax.numpy as jnp
from jax.experimental import pallas as pl
from jax.experimental.pallas import tpu as pltpu


_EPS = 1e-5
# MXU operand dtype for the conv matmuls (accumulation is always f32).
# Set to jnp.float32 for strict fp32 parity with PyTorch.
MATMUL_DTYPE = jnp.bfloat16
_VMEM_LIMIT = 32 * 1024 * 1024  # safe on v5e / v6e / v7x


# ----------------------------------------------------------------------------
# Kernel 1 (fused, per layer):
#   [optional: input BN scale/shift + ReLU]  ->  3x3 conv (9 shifted MXU
#   matmuls, bf16 operands, f32 accumulate) + bias  ->  conv output y and
#   per-batch partial sum / sum-of-squares over H*W (BatchNorm batch stats).
# ----------------------------------------------------------------------------
def _fused_conv_kernel(x_ref, scale_ref, shift_ref, w_ref, b_ref,
                       y_ref, psum_ref, psq_ref,
                       pad_ref,
                       *, H, W, Cin, Cout, apply_act):
    x = x_ref[0]                                        # (H, W, Cin) f32

    if apply_act:                                       # previous layer's BN+ReLU
        scale = scale_ref[...].reshape(1, 1, Cin)
        shift = shift_ref[...].reshape(1, 1, Cin)
        x = jnp.maximum(x * scale + shift, 0.0)

    # In-VMEM zero padding (no HBM pad pass).  Re-zeroed every grid step so
    # the kernel carries no state across iterations / cores.
    pad_ref[...] = jnp.zeros_like(pad_ref)
    pad_ref[1:H + 1, 1:W + 1, :] = x

    # 3x3 conv as 9 shifted matmuls, each (H*W, Cin) x (Cin, Cout),
    # accumulated in f32 on the MXU.
    acc = jnp.zeros((H * W, Cout), jnp.float32)
    for t in range(9):
        kh, kw = t // 3, t % 3
        piece = pad_ref[kh:kh + H, kw:kw + W, :].reshape(H * W, Cin)
        acc = acc + jnp.dot(piece.astype(MATMUL_DTYPE), w_ref[t],
                            preferred_element_type=jnp.float32)
    acc = acc + b_ref[...]                              # bias, (1, Cout) bcast

    y_ref[0] = acc.reshape(H, W, Cout)
    # Per-batch partial BatchNorm statistics (reduced over N in tiny JAX math).
    psum_ref[...] = jnp.sum(acc, axis=0, keepdims=True).reshape(1, 1, Cout)
    psq_ref[...] = jnp.sum(acc * acc, axis=0, keepdims=True).reshape(1, 1, Cout)


def fused_conv(x_nhwc, in_scale, in_shift, w, b, *, apply_act):
    N, H, W, Cin = x_nhwc.shape
    Cout = w.shape[-1]
    # (3, 3, Cin, Cout) -> (9, Cin, Cout); tap t = kh*3 + kw.
    w_taps = w.reshape(9, Cin, Cout).astype(MATMUL_DTYPE)

    if in_scale is None:
        in_scale = jnp.ones((Cin,), jnp.float32)
        in_shift = jnp.zeros((Cin,), jnp.float32)

    kern = functools.partial(_fused_conv_kernel, H=H, W=W, Cin=Cin, Cout=Cout,
                             apply_act=apply_act)
    return pl.pallas_call(
        kern,
        out_shape=(jax.ShapeDtypeStruct((N, H, W, Cout), jnp.float32),
                   jax.ShapeDtypeStruct((N, 1, Cout), jnp.float32),
                   jax.ShapeDtypeStruct((N, 1, Cout), jnp.float32)),
        grid=(N,),
        in_specs=[
            pl.BlockSpec((1, H, W, Cin), lambda n: (n, 0, 0, 0)),
            pl.BlockSpec((1, Cin), lambda n: (0, 0)),
            pl.BlockSpec((1, Cin), lambda n: (0, 0)),
            pl.BlockSpec((9, Cin, Cout), lambda n: (0, 0, 0)),
            pl.BlockSpec((1, Cout), lambda n: (0, 0)),
        ],
        out_specs=(pl.BlockSpec((1, H, W, Cout), lambda n: (n, 0, 0, 0)),
                   pl.BlockSpec((1, 1, Cout), lambda n: (n, 0, 0)),
                   pl.BlockSpec((1, 1, Cout), lambda n: (n, 0, 0))),
        scratch_shapes=[
            pltpu.VMEM((H + 2, W + 2, Cin), jnp.float32),   # padded input
        ],
        compiler_params=pltpu.CompilerParams(
            dimension_semantics=("parallel",),            # v7x: 2 TCs share batch
            vmem_limit_bytes=_VMEM_LIMIT),
    )(x_nhwc, in_scale.reshape(1, Cin), in_shift.reshape(1, Cin), w_taps,
      b.reshape(1, Cout))


# ----------------------------------------------------------------------------
# Kernel 2: element-wise BN (precomputed scale/shift) + ReLU for the FINAL
# layer's output only (earlier BN+ReLU is fused into the next conv kernel).
# ----------------------------------------------------------------------------
def _bn_relu_kernel(y_ref, scale_ref, shift_ref, o_ref):
    y = y_ref[0]                                        # (H, W, C)
    scale = scale_ref[...].reshape(1, 1, -1)
    shift = shift_ref[...].reshape(1, 1, -1)
    o_ref[0] = jnp.maximum(y * scale + shift, 0.0)


def bn_relu(y_nhwc, scale, shift):
    N, H, W, C = y_nhwc.shape
    return pl.pallas_call(
        _bn_relu_kernel,
        out_shape=jax.ShapeDtypeStruct((N, H, W, C), jnp.float32),
        grid=(N,),
        in_specs=[
            pl.BlockSpec((1, H, W, C), lambda n: (n, 0, 0, 0)),
            pl.BlockSpec((1, C), lambda n: (0, 0)),
            pl.BlockSpec((1, C), lambda n: (0, 0)),
        ],
        out_specs=pl.BlockSpec((1, H, W, C), lambda n: (n, 0, 0, 0)),
        compiler_params=pltpu.CompilerParams(
            dimension_semantics=("parallel",),
            vmem_limit_bytes=_VMEM_LIMIT),
    )(y_nhwc, scale.reshape(1, C), shift.reshape(1, C))


# ----------------------------------------------------------------------------
# conv_block forward:  [conv3x3 + bias -> BN (batch stats) -> ReLU] x 2
# ----------------------------------------------------------------------------
def conv_block_forward(x_nchw, params):
    x = jnp.transpose(x_nchw, (0, 2, 3, 1)).astype(jnp.float32)  # NCHW -> NHWC
    N, H, W, _ = x.shape
    cnt = float(N * H * W)

    inp, scale, shift, y = x, None, None, None
    for i in (1, 2):
        w, b = params[f"w{i}"], params[f"b{i}"]
        gamma, beta = params[f"gamma{i}"], params[f"beta{i}"]

        # Fused: (prev-layer BN+ReLU) + conv + bias + partial batch stats.
        y, psum, psq = fused_conv(inp, scale, shift, w, b, apply_act=(i == 2))

        s = jnp.sum(psum, axis=0)[0]                    # (Cout,)
        q = jnp.sum(psq, axis=0)[0]                     # (Cout,)
        mean = s / cnt
        var = jnp.maximum(q / cnt - mean * mean, 0.0)   # clamp (cancellation)
        scale = gamma * jax.lax.rsqrt(var + _EPS)
        shift = beta - mean * scale
        inp = y

    out = bn_relu(y, scale, shift)                      # final BN+ReLU pass
    return jnp.transpose(out, (0, 3, 1, 2))             # back to NCHW


# ----------------------------------------------------------------------------
# Pure-JAX reference (same math, same matmul operand dtype) for correctness.
# ----------------------------------------------------------------------------
def conv_block_ref(x_nchw, params):
    x = jnp.transpose(x_nchw, (0, 2, 3, 1)).astype(jnp.float32)
    for i in (1, 2):
        w, b = params[f"w{i}"], params[f"b{i}"]
        gamma, beta = params[f"gamma{i}"], params[f"beta{i}"]
        y = jax.lax.conv_general_dilated(
            x.astype(MATMUL_DTYPE), w.astype(MATMUL_DTYPE),
            window_strides=(1, 1), padding=((1, 1), (1, 1)),
            dimension_numbers=("NHWC", "HWIO", "NHWC"),
            preferred_element_type=jnp.float32) + b
        mean = jnp.mean(y, axis=(0, 1, 2))
        var = jnp.var(y, axis=(0, 1, 2))
        y = (y - mean) * jax.lax.rsqrt(var + _EPS) * gamma + beta
        x = jnp.maximum(y, 0.0)
    return jnp.transpose(x, (0, 3, 1, 2))


def make_params(key, ch_in, ch_out):
    ks = jax.random.split(key, 6)
    return {
        "w1": 0.2 * jax.random.normal(ks[0], (3, 3, ch_in, ch_out), jnp.float32),
        "b1": 0.1 * jax.random.normal(ks[1], (ch_out,), jnp.float32),
        "gamma1": 1.0 + 0.1 * jax.random.normal(ks[2], (ch_out,), jnp.float32),
        "beta1": 0.05 * jax.random.normal(ks[3], (ch_out,), jnp.float32),
        "w2": 0.2 * jax.random.normal(ks[4], (3, 3, ch_out, ch_out), jnp.float32),
        "b2": 0.1 * jax.random.normal(ks[5], (ch_out,), jnp.float32),
        "gamma2": jnp.ones((ch_out,), jnp.float32),
        "beta2": jnp.zeros((ch_out,), jnp.float32),
    }


if __name__ == "__main__":
    N, C_IN, C_OUT, H, W = 2, 4, 8, 16, 16
    key = jax.random.PRNGKey(0)
    kx, kp = jax.random.split(key)
    x = jax.random.normal(kx, (N, C_IN, H, W), jnp.float32)   # NCHW like PyTorch
    params = make_params(kp, C_IN, C_OUT)

    out = jax.block_until_ready(conv_block_forward(x, params))
    ref = jax.block_until_ready(conv_block_ref(x, params))

    assert out.shape == (N, C_OUT, H, W), out.shape
    # Tolerance accounts for bf16 MXU operands + differing f32 reduction order.
    err = float(jnp.max(jnp.abs(out - ref)))
    assert jnp.allclose(out, ref, rtol=1e-2, atol=1e-2), err
    print("KERNEL_OK")
</pallas_src>

<mosaic_0001>
module attributes {stable_mosaic.version = 11 : i64} {
  func.func @_fused_conv_kernel(%arg0: i32, %arg1: memref<1x16x16x4xf32, #tpu.memory_space<vmem>>, %arg2: memref<1x4xf32, #tpu.memory_space<vmem>>, %arg3: memref<1x4xf32, #tpu.memory_space<vmem>>, %arg4: memref<9x4x8xbf16, #tpu.memory_space<vmem>>, %arg5: memref<1x8xf32, #tpu.memory_space<vmem>>, %arg6: memref<1x16x16x8xf32, #tpu.memory_space<vmem>>, %arg7: memref<1x1x8xf32, #tpu.memory_space<vmem>>, %arg8: memref<1x1x8xf32, #tpu.memory_space<vmem>>, %arg9: memref<18x18x4xf32, #tpu.memory_space<vmem>>) attributes {dimension_semantics = [#tpu.dimension_semantics<parallel>], iteration_bounds = array<i64: 2>, scalar_prefetch = 0 : i64, scratch_operands = 1 : i64, tpu.core_type = #tpu.core_type<tc>, window_params = [{transform_indices = @transform_0, window_bounds = array<i64: 1, 16, 16, 4>}, {pipeline_mode = #tpu.pipeline_mode<synchronous>, transform_indices = @transform_1, window_bounds = array<i64: 1, 4>}, {pipeline_mode = #tpu.pipeline_mode<synchronous>, transform_indices = @transform_2, window_bounds = array<i64: 1, 4>}, {pipeline_mode = #tpu.pipeline_mode<synchronous>, transform_indices = @transform_3, window_bounds = array<i64: 9, 4, 8>}, {pipeline_mode = #tpu.pipeline_mode<synchronous>, transform_indices = @transform_4, window_bounds = array<i64: 1, 8>}, {transform_indices = @transform_5, window_bounds = array<i64: 1, 16, 16, 8>}, {transform_indices = @transform_6, window_bounds = array<i64: 1, 1, 8>}, {transform_indices = @transform_7, window_bounds = array<i64: 1, 1, 8>}]} {
    %c0 = arith.constant 0 : index
    %c0_0 = arith.constant 0 : index
    %c0_1 = arith.constant 0 : index
    %c0_2 = arith.constant 0 : index
    %0 = vector.load %arg1[%c0, %c0_0, %c0_1, %c0_2] : memref<1x16x16x4xf32, #tpu.memory_space<vmem>>, vector<1x16x16x4xf32>
    %1 = vector.shape_cast %0 : vector<1x16x16x4xf32> to vector<16x16x4xf32>
    %cst = arith.constant 0.000000e+00 : f32
    %2 = vector.broadcast %cst : f32 to vector<18x18x4xf32>
    %c0_3 = arith.constant 0 : index
    %c0_4 = arith.constant 0 : index
    %c0_5 = arith.constant 0 : index
    %3 = vector.load %arg9[%c0_3, %c0_4, %c0_5] : memref<18x18x4xf32, #tpu.memory_space<vmem>>, vector<18x18x4xf32>
    tpu.vector_store %arg9[%c0_3, %c0_4, %c0_5], %2 {strides = array<i32>} : memref<18x18x4xf32, #tpu.memory_space<vmem>>, vector<18x18x4xf32>,
    %c1 = arith.constant 1 : index
    %c1_6 = arith.constant 1 : index
    %c0_7 = arith.constant 0 : index
    %4 = vector.load %arg9[%c1, %c1_6, %c0_7] : memref<18x18x4xf32, #tpu.memory_space<vmem>>, vector<16x16x4xf32>
    tpu.vector_store %arg9[%c1, %c1_6, %c0_7], %1 {strides = array<i32>} : memref<18x18x4xf32, #tpu.memory_space<vmem>>, vector<16x16x4xf32>,
    %cst_8 = arith.constant 0.000000e+00 : f32
    %5 = vector.broadcast %cst_8 : f32 to vector<256x8xf32>
    %c0_9 = arith.constant 0 : index
    %c0_10 = arith.constant 0 : index
    %c0_11 = arith.constant 0 : index
    %6 = vector.load %arg9[%c0_9, %c0_10, %c0_11] : memref<18x18x4xf32, #tpu.memory_space<vmem>>, vector<16x16x4xf32>
    %7 = vector.shape_cast %6 : vector<16x16x4xf32> to vector<256x4xf32>
    %8 = arith.truncf %7 : vector<256x4xf32> to vector<256x4xbf16>
    %c0_12 = arith.constant 0 : index
    %c0_13 = arith.constant 0 : index
    %c0_14 = arith.constant 0 : index
    %9 = vector.load %arg4[%c0_12, %c0_13, %c0_14] : memref<9x4x8xbf16, #tpu.memory_space<vmem>>, vector<1x4x8xbf16>
    %10 = vector.shape_cast %9 : vector<1x4x8xbf16> to vector<4x8xbf16>
    %cst_15 = arith.constant dense<0.000000e+00> : vector<256x8xf32>
    %11 = tpu.matmul %8, %10, %cst_15 {dimension_numbers = #tpu.dot_dimension_numbers<[1], [0], [0], [1], [0, 0, 1, 1], [], []>} : vector<256x4xbf16>, vector<4x8xbf16>, vector<256x8xf32> -> vector<256x8xf32>
    %12 = arith.addf %5, %11 : vector<256x8xf32>
    %c0_16 = arith.constant 0 : index
    %c1_17 = arith.constant 1 : index
    %c0_18 = arith.constant 0 : index
    %13 = vector.load %arg9[%c0_16, %c1_17, %c0_18] : memref<18x18x4xf32, #tpu.memory_space<vmem>>, vector<16x16x4xf32>
    %14 = vector.shape_cast %13 : vector<16x16x4xf32> to vector<256x4xf32>
    %15 = arith.truncf %14 : vector<256x4xf32> to vector<256x4xbf16>
    %c1_19 = arith.constant 1 : index
    %c0_20 = arith.constant 0 : index
    %c0_21 = arith.constant 0 : index
    %16 = vector.load %arg4[%c1_19, %c0_20, %c0_21] : memref<9x4x8xbf16, #tpu.memory_space<vmem>>, vector<1x4x8xbf16>
    %17 = vector.shape_cast %16 : vector<1x4x8xbf16> to vector<4x8xbf16>
    %cst_22 = arith.constant dense<0.000000e+00> : vector<256x8xf32>
    %18 = tpu.matmul %15, %17, %cst_22 {dimension_numbers = #tpu.dot_dimension_numbers<[1], [0], [0], [1], [0, 0, 1, 1], [], []>} : vector<256x4xbf16>, vector<4x8xbf16>, vector<256x8xf32> -> vector<256x8xf32>
    %19 = arith.addf %12, %18 : vector<256x8xf32>
    %c0_23 = arith.constant 0 : index
    %c2 = arith.constant 2 : index
    %c0_24 = arith.constant 0 : index
    %20 = vector.load %arg9[%c0_23, %c2, %c0_24] : memref<18x18x4xf32, #tpu.memory_space<vmem>>, vector<16x16x4xf32>
    %21 = vector.shape_cast %20 : vector<16x16x4xf32> to vector<256x4xf32>
    %22 = arith.truncf %21 : vector<256x4xf32> to vector<256x4xbf16>
    %c2_25 = arith.constant 2 : index
    %c0_26 = arith.constant 0 : index
    %c0_27 = arith.constant 0 : index
    %23 = vector.load %arg4[%c2_25, %c0_26, %c0_27] : memref<9x4x8xbf16, #tpu.memory_space<vmem>>, vector<1x4x8xbf16>
    %24 = vector.shape_cast %23 : vector<1x4x8xbf16> to vector<4x8xbf16>
    %cst_28 = arith.constant dense<0.000000e+00> : vector<256x8xf32>
    %25 = tpu.matmul %22, %24, %cst_28 {dimension_numbers = #tpu.dot_dimension_numbers<[1], [0], [0], [1], [0, 0, 1, 1], [], []>} : vector<256x4xbf16>, vector<4x8xbf16>, vector<256x8xf32> -> vector<256x8xf32>
    %26 = arith.addf %19, %25 : vector<256x8xf32>
    %c1_29 = arith.constant 1 : index
    %c0_30 = arith.constant 0 : index
    %c0_31 = arith.constant 0 : index
    %27 = vector.load %arg9[%c1_29, %c0_30, %c0_31] : memref<18x18x4xf32, #tpu.memory_space<vmem>>, vector<16x16x4xf32>
    %28 = vector.shape_cast %27 : vector<16x16x4xf32> to vector<256x4xf32>
    %29 = arith.truncf %28 : vector<256x4xf32> to vector<256x4xbf16>
    %c3 = arith.constant 3 : index
    %c0_32 = arith.constant 0 : index
    %c0_33 = arith.constant 0 : index
    %30 = vector.load %arg4[%c3, %c0_32, %c0_33] : memref<9x4x8xbf16, #tpu.memory_space<vmem>>, vector<1x4x8xbf16>
    %31 = vector.shape_cast %30 : vector<1x4x8xbf16> to vector<4x8xbf16>
    %cst_34 = arith.constant dense<0.000000e+00> : vector<256x8xf32>
    %32 = tpu.matmul %29, %31, %cst_34 {dimension_numbers = #tpu.dot_dimension_numbers<[1], [0], [0], [1], [0, 0, 1, 1], [], []>} : vector<256x4xbf16>, vector<4x8xbf16>, vector<256x8xf32> -> vector<256x8xf32>
    %33 = arith.addf %26, %32 : vector<256x8xf32>
    %c1_35 = arith.constant 1 : index
    %c1_36 = arith.constant 1 : index
    %c0_37 = arith.constant 0 : index
    %34 = vector.load %arg9[%c1_35, %c1_36, %c0_37] : memref<18x18x4xf32, #tpu.memory_space<vmem>>, vector<16x16x4xf32>
    %35 = vector.shape_cast %34 : vector<16x16x4xf32> to vector<256x4xf32>
    %36 = arith.truncf %35 : vector<256x4xf32> to vector<256x4xbf16>
    %c4 = arith.constant 4 : index
    %c0_38 = arith.constant 0 : index
    %c0_39 = arith.constant 0 : index
    %37 = vector.load %arg4[%c4, %c0_38, %c0_39] : memref<9x4x8xbf16, #tpu.memory_space<vmem>>, vector<1x4x8xbf16>
    %38 = vector.shape_cast %37 : vector<1x4x8xbf16> to vector<4x8xbf16>
    %cst_40 = arith.constant dense<0.000000e+00> : vector<256x8xf32>
    %39 = tpu.matmul %36, %38, %cst_40 {dimension_numbers = #tpu.dot_dimension_numbers<[1], [0], [0], [1], [0, 0, 1, 1], [], []>} : vector<256x4xbf16>, vector<4x8xbf16>, vector<256x8xf32> -> vector<256x8xf32>
    %40 = arith.addf %33, %39 : vector<256x8xf32>
    %c1_41 = arith.constant 1 : index
    %c2_42 = arith.constant 2 : index
    %c0_43 = arith.constant 0 : index
    %41 = vector.load %arg9[%c1_41, %c2_42, %c0_43] : memref<18x18x4xf32, #tpu.memory_space<vmem>>, vector<16x16x4xf32>
    %42 = vector.shape_cast %41 : vector<16x16x4xf32> to vector<256x4xf32>
    %43 = arith.truncf %42 : vector<256x4xf32> to vector<256x4xbf16>
    %c5 = arith.constant 5 : index
    %c0_44 = arith.constant 0 : index
    %c0_45 = arith.constant 0 : index
    %44 = vector.load %arg4[%c5, %c0_44, %c0_45] : memref<9x4x8xbf16, #tpu.memory_space<vmem>>, vector<1x4x8xbf16>
    %45 = vector.shape_cast %44 : vector<1x4x8xbf16> to vector<4x8xbf16>
    %cst_46 = arith.constant dense<0.000000e+00> : vector<256x8xf32>
    %46 = tpu.matmul %43, %45, %cst_46 {dimension_numbers = #tpu.dot_dimension_numbers<[1], [0], [0], [1], [0, 0, 1, 1], [], []>} : vector<256x4xbf16>, vector<4x8xbf16>, vector<256x8xf32> -> vector<256x8xf32>
    %47 = arith.addf %40, %46 : vector<256x8xf32>
    %c2_47 = arith.constant 2 : index
    %c0_48 = arith.constant 0 : index
    %c0_49 = arith.constant 0 : index
    %48 = vector.load %arg9[%c2_47, %c0_48, %c0_49] : memref<18x18x4xf32, #tpu.memory_space<vmem>>, vector<16x16x4xf32>
    %49 = vector.shape_cast %48 : vector<16x16x4xf32> to vector<256x4xf32>
    %50 = arith.truncf %49 : vector<256x4xf32> to vector<256x4xbf16>
    %c6 = arith.constant 6 : index
    %c0_50 = arith.constant 0 : index
    %c0_51 = arith.constant 0 : index
    %51 = vector.load %arg4[%c6, %c0_50, %c0_51] : memref<9x4x8xbf16, #tpu.memory_space<vmem>>, vector<1x4x8xbf16>
    %52 = vector.shape_cast %51 : vector<1x4x8xbf16> to vector<4x8xbf16>
    %cst_52 = arith.constant dense<0.000000e+00> : vector<256x8xf32>
    %53 = tpu.matmul %50, %52, %cst_52 {dimension_numbers = #tpu.dot_dimension_numbers<[1], [0], [0], [1], [0, 0, 1, 1], [], []>} : vector<256x4xbf16>, vector<4x8xbf16>, vector<256x8xf32> -> vector<256x8xf32>
    %54 = arith.addf %47, %53 : vector<256x8xf32>
    %c2_53 = arith.constant 2 : index
    %c1_54 = arith.constant 1 : index
    %c0_55 = arith.constant 0 : index
    %55 = vector.load %arg9[%c2_53, %c1_54, %c0_55] : memref<18x18x4xf32, #tpu.memory_space<vmem>>, vector<16x16x4xf32>
    %56 = vector.shape_cast %55 : vector<16x16x4xf32> to vector<256x4xf32>
    %57 = arith.truncf %56 : vector<256x4xf32> to vector<256x4xbf16>
    %c7 = arith.constant 7 : index
    %c0_56 = arith.constant 0 : index
    %c0_57 = arith.constant 0 : index
    %58 = vector.load %arg4[%c7, %c0_56, %c0_57] : memref<9x4x8xbf16, #tpu.memory_space<vmem>>, vector<1x4x8xbf16>
    %59 = vector.shape_cast %58 : vector<1x4x8xbf16> to vector<4x8xbf16>
    %cst_58 = arith.constant dense<0.000000e+00> : vector<256x8xf32>
    %60 = tpu.matmul %57, %59, %cst_58 {dimension_numbers = #tpu.dot_dimension_numbers<[1], [0], [0], [1], [0, 0, 1, 1], [], []>} : vector<256x4xbf16>, vector<4x8xbf16>, vector<256x8xf32> -> vector<256x8xf32>
    %61 = arith.addf %54, %60 : vector<256x8xf32>
    %c2_59 = arith.constant 2 : index
    %c2_60 = arith.constant 2 : index
    %c0_61 = arith.constant 0 : index
    %62 = vector.load %arg9[%c2_59, %c2_60, %c0_61] : memref<18x18x4xf32, #tpu.memory_space<vmem>>, vector<16x16x4xf32>
    %63 = vector.shape_cast %62 : vector<16x16x4xf32> to vector<256x4xf32>
    %64 = arith.truncf %63 : vector<256x4xf32> to vector<256x4xbf16>
    %c8 = arith.constant 8 : index
    %c0_62 = arith.constant 0 : index
    %c0_63 = arith.constant 0 : index
    %65 = vector.load %arg4[%c8, %c0_62, %c0_63] : memref<9x4x8xbf16, #tpu.memory_space<vmem>>, vector<1x4x8xbf16>
    %66 = vector.shape_cast %65 : vector<1x4x8xbf16> to vector<4x8xbf16>
    %cst_64 = arith.constant dense<0.000000e+00> : vector<256x8xf32>
    %67 = tpu.matmul %64, %66, %cst_64 {dimension_numbers = #tpu.dot_dimension_numbers<[1], [0], [0], [1], [0, 0, 1, 1], [], []>} : vector<256x4xbf16>, vector<4x8xbf16>, vector<256x8xf32> -> vector<256x8xf32>
    %68 = arith.addf %61, %67 : vector<256x8xf32>
    %c0_65 = arith.constant 0 : index
    %c0_66 = arith.constant 0 : index
    %69 = vector.load %arg5[%c0_65, %c0_66] : memref<1x8xf32, #tpu.memory_space<vmem>>, vector<1x8xf32>
    %70 = vector.broadcast %69 : vector<1x8xf32> to vector<256x8xf32>
    %71 = arith.addf %68, %70 : vector<256x8xf32>
    %72 = vector.shape_cast %71 : vector<256x8xf32> to vector<16x16x8xf32>
    %c0_67 = arith.constant 0 : index
    %c0_68 = arith.constant 0 : index
    %c0_69 = arith.constant 0 : index
    %c0_70 = arith.constant 0 : index
    %73 = vector.load %arg6[%c0_67, %c0_68, %c0_69, %c0_70] : memref<1x16x16x8xf32, #tpu.memory_space<vmem>>, vector<1x16x16x8xf32>
    %74 = vector.shape_cast %73 : vector<1x16x16x8xf32> to vector<16x16x8xf32>
    %75 = vector.shape_cast %72 : vector<16x16x8xf32> to vector<1x16x16x8xf32>
    tpu.vector_store %arg6[%c0_67, %c0_68, %c0_69, %c0_70], %75 {strides = array<i32>} : memref<1x16x16x8xf32, #tpu.memory_space<vmem>>, vector<1x16x16x8xf32>,
    %cst_71 = arith.constant dense<0.000000e+00> : vector<8xf32>
    %76 = vector.multi_reduction <add>, %71, %cst_71 [0] : vector<256x8xf32> to vector<8xf32>
    %77 = vector.shape_cast %76 : vector<8xf32> to vector<1x8xf32>
    %78 = vector.shape_cast %77 : vector<1x8xf32> to vector<1x1x8xf32>
    %c0_72 = arith.constant 0 : index
    %c0_73 = arith.constant 0 : index
    %c0_74 = arith.constant 0 : index
    %79 = vector.load %arg7[%c0_72, %c0_73, %c0_74] : memref<1x1x8xf32, #tpu.memory_space<vmem>>, vector<1x1x8xf32>
    tpu.vector_store %arg7[%c0_72, %c0_73, %c0_74], %78 {strides = array<i32>} : memref<1x1x8xf32, #tpu.memory_space<vmem>>, vector<1x1x8xf32>,
    %80 = arith.mulf %71, %71 : vector<256x8xf32>
    %cst_75 = arith.constant dense<0.000000e+00> : vector<8xf32>
    %81 = vector.multi_reduction <add>, %80, %cst_75 [0] : vector<256x8xf32> to vector<8xf32>
    %82 = vector.shape_cast %81 : vector<8xf32> to vector<1x8xf32>
    %83 = vector.shape_cast %82 : vector<1x8xf32> to vector<1x1x8xf32>
    %c0_76 = arith.constant 0 : index
    %c0_77 = arith.constant 0 : index
    %c0_78 = arith.constant 0 : index
    %84 = vector.load %arg8[%c0_76, %c0_77, %c0_78] : memref<1x1x8xf32, #tpu.memory_space<vmem>>, vector<1x1x8xf32>
    tpu.vector_store %arg8[%c0_76, %c0_77, %c0_78], %83 {strides = array<i32>} : memref<1x1x8xf32, #tpu.memory_space<vmem>>, vector<1x1x8xf32>,
    return
  }
  func.func @transform_0(%arg0: i32) -> (i32, i32, i32, i32) {
    %c0_i32 = arith.constant 0 : i32
    %c0_i32_0 = arith.constant 0 : i32
    %c0_i32_1 = arith.constant 0 : i32
    %c0_i32_2 = arith.constant 0 : i32
    return %arg0, %c0_i32, %c0_i32_0, %c0_i32_1 : i32, i32, i32, i32
  }
  func.func @transform_1(%arg0: i32) -> (i32, i32) {
    %c0_i32 = arith.constant 0 : i32
    %c0_i32_0 = arith.constant 0 : i32
    %c0_i32_1 = arith.constant 0 : i32
    return %c0_i32, %c0_i32_0 : i32, i32
  }
  func.func @transform_2(%arg0: i32) -> (i32, i32) {
    %c0_i32 = arith.constant 0 : i32
    %c0_i32_0 = arith.constant 0 : i32
    %c0_i32_1 = arith.constant 0 : i32
    return %c0_i32, %c0_i32_0 : i32, i32
  }
  func.func @transform_3(%arg0: i32) -> (i32, i32, i32) {
    %c0_i32 = arith.constant 0 : i32
    %c0_i32_0 = arith.constant 0 : i32
    %c0_i32_1 = arith.constant 0 : i32
    %c0_i32_2 = arith.constant 0 : i32
    return %c0_i32, %c0_i32_0, %c0_i32_1 : i32, i32, i32
  }
  func.func @transform_4(%arg0: i32) -> (i32, i32) {
    %c0_i32 = arith.constant 0 : i32
    %c0_i32_0 = arith.constant 0 : i32
    %c0_i32_1 = arith.constant 0 : i32
    return %c0_i32, %c0_i32_0 : i32, i32
  }
  func.func @transform_5(%arg0: i32) -> (i32, i32, i32, i32) {
    %c0_i32 = arith.constant 0 : i32
    %c0_i32_0 = arith.constant 0 : i32
    %c0_i32_1 = arith.constant 0 : i32
    %c0_i32_2 = arith.constant 0 : i32
    return %arg0, %c0_i32, %c0_i32_0, %c0_i32_1 : i32, i32, i32, i32
  }
  func.func @transform_6(%arg0: i32) -> (i32, i32, i32) {
    %c0_i32 = arith.constant 0 : i32
    %c0_i32_0 = arith.constant 0 : i32
    %c0_i32_1 = arith.constant 0 : i32
    return %arg0, %c0_i32, %c0_i32_0 : i32, i32, i32
  }
  func.func @transform_7(%arg0: i32) -> (i32, i32, i32) {
    %c0_i32 = arith.constant 0 : i32
    %c0_i32_0 = arith.constant 0 : i32
    %c0_i32_1 = arith.constant 0 : i32
    return %arg0, %c0_i32, %c0_i32_0 : i32, i32, i32
  }
}

</mosaic_0001>

<llo_original>
// kernel: tpu_custom_call.1
$region0: #{tpu_custom_call.1}
  #allocation0 [shape = 'u32[]', space=smem, size = 0x4, offset = 0x4, fixed_abs, tag = 'smem constant byte address 0x4 - core index']
  #allocation1 [shape = 'u32[72,128]{1,0:T(1,128)}', space=vmem, size = 0x9000, scoped, tag = 'internal scratch']
  #allocation2 [shape = 'f32[18,18,4]{2,1,0:T(8,128)}', space=vmem, size = 0x36000, scoped, tag = 'scratch operand']
  %s0 = inlined_call_operand.vmem [shape: f32[2,16,16,4], index: 0, kind: input, shape index: {}]
  %s1 = inlined_call_operand.vmem [shape: f32[1,4], index: 1, kind: input, shape index: {}]
  %s2 = inlined_call_operand.vmem [shape: f32[1,4], index: 2, kind: input, shape index: {}]
  %s3 = inlined_call_operand.vmem [shape: bf16[9,4,8], index: 3, kind: input, shape index: {}]
  %s4 = inlined_call_operand.vmem [shape: f32[1,8], index: 4, kind: input, shape index: {}]
  %s5 = inlined_call_operand.vmem [shape: f32[2,16,16,8], index: 5, kind: output, shape index: {0}]
  %s6 = inlined_call_operand.hbm [shape: f32[2,1,8], index: 6, kind: output, shape index: {1}]
  %s7 = inlined_call_operand.hbm [shape: f32[2,1,8], index: 7, kind: output, shape index: {2}]
  %8 = xla_tuple %s5, %s6, %s7
  %s9 = sld [smem:[#allocation0]]
  $region69: #{tpu_custom_call.1} parent=0
    _
  %s11 = ssub.s32 1, %s9
  %s12 = scalar_select 0, %s11, %s9
  $region1: #{tpu_custom_call.1} parent=0
    #allocation3 [shape = 'u8[1024]{0}', space=vmem, size = 0x400, scoped, tag = 'output window, operand 1']
    #allocation4 [shape = 's32[2]{0}', space=sflag, size = 0x8, scoped, tag = 'scoped memory for tpu_custom_call.1']
    #allocation5 [shape = 'u8[1024]{0}', space=vmem, size = 0x400, scoped, tag = 'output window, operand 2']
    #allocation6 [shape = 's32[2]{0}', space=sflag, size = 0x8, scoped, tag = 'scoped memory for tpu_custom_call.1']
    %13 = vsyncpa [#allocation4], 0
    %s14 = scalar_lea.sflag [#allocation4], 1
    %15 = vsyncpa %s14, 0
    %16 = vsyncpa [#allocation6], 0
    %s17 = scalar_lea.sflag [#allocation6], 1
    %18 = vsyncpa %s17, 0
    loop: start=0, step=1, limit=4
    $region2: #{tpu_custom_call.1} parent=1 // loop_pre_header
      _
    $region3: #{tpu_custom_call.1} parent=1 // loop_header
      %s20 = sphi 0, %s24
      %p21 = scmp.ge.s32.totalorder %s20, 4
      %s30 = sphi 0, %s32
      %s33 = sphi 0, %s30
      %s34 = sphi 0, %s33
      %s50 = sphi 0, %s34
      %s54 = sphi 0, %s54
      %s56 = sphi 0, %s54
      %s57 = sphi 0, %s56
      %s71 = sphi 0, %s57
      %s75 = sphi 0, %s75
      %s77 = sphi 0, %s75
      %s78 = sphi 0, %s77
      %s92 = sphi 0, %s78
      %s96 = sphi 0, %s96
      %s98 = sphi 0, %s96
      %s99 = sphi 0, %s98
      %s113 = sphi 0, %s99
      %s117 = sphi 0, %s117
      %s119 = sphi 0, %s117
      %s120 = sphi 0, %s119
      %s134 = sphi 0, %s120
      %s140 = sphi 0, %s142
      %s143 = sphi 0, %s140
      %s144 = sphi 0, %s143
      %s160 = sphi 0, %s144
      %s166 = sphi 0, %s168
      %s169 = sphi 0, %s166
      %s170 = sphi 0, %s169
      %s186 = sphi 0, %s170
      %s192 = sphi 0, %s194
      %s195 = sphi 0, %s192
      %s196 = sphi 0, %s195
      %s212 = sphi 0, %s196
    $region4: #{tpu_custom_call.1} parent=1 // loop_header_branch
      %23 = sbr.rel (%p21) target = $region8
    $region5: #{tpu_custom_call.1} parent=1 // loop_body
      %s25 = ssub.s32 %s20, 1
      %s26 = ssub.s32 %s20, 2
      %s27 = sadd.s32 %s20, 1
      %s28 = ssub.s32 %s20, %s27
      %p29 = scmp.eq.s32.totalorder %s28, 0
      %s31 = sadd.s32 %s30, 1
      %s32 = scalar_select %p29, %s30, %s31
      %p35 = pneg %p29
      %p36 = scmp.eq.s32.totalorder %s20, 1
      %p37 = por %p35, %p36
      %p38 = scmp.ne.s32.totalorder %s30, %s33
      %p39 = scmp.eq.s32.totalorder %s20, 0
      %p40 = por %p38, %p39
      %p41 = scmp.ne.s32.totalorder %s30, %s33
      %p42 = scmp.eq.s32.totalorder %s25, 1
      %p43 = por %p41, %p42
      %p44 = scmp.ne.s32.totalorder %s33, %s34
      %p45 = scmp.eq.s32.totalorder %s25, 0
      %p46 = por %p44, %p45
      %p47 = scmp.ne.s32.totalorder %s33, %s34
      %p48 = scmp.eq.s32.totalorder %s26, 1
      %p49 = por %p47, %p48
      %p51 = scmp.ne.s32.totalorder %s34, %s50
      %p52 = scmp.eq.s32.totalorder %s26, 0
      %p53 = por %p51, %p52
      %s55 = sadd.s32 %s54, 1
      %p58 = scmp.eq.s32.totalorder %s20, 1
      %p59 = scmp.ne.s32.totalorder %s54, %s56
      %p60 = scmp.eq.s32.totalorder %s20, 0
      %p61 = por %p59, %p60
      %p62 = scmp.ne.s32.totalorder %s54, %s56
      %p63 = scmp.eq.s32.totalorder %s25, 1
      %p64 = por %p62, %p63
      %p65 = scmp.ne.s32.totalorder %s56, %s57
      %p66 = scmp.eq.s32.totalorder %s25, 0
      %p67 = por %p65, %p66
      %p68 = scmp.ne.s32.totalorder %s56, %s57
      %p69 = scmp.eq.s32.totalorder %s26, 1
      %p70 = por %p68, %p69
      %p72 = scmp.ne.s32.totalorder %s57, %s71
      %p73 = scmp.eq.s32.totalorder %s26, 0
      %p74 = por %p72, %p73
      %s76 = sadd.s32 %s75, 1
      %p79 = scmp.eq.s32.totalorder %s20, 1
      %p80 = scmp.ne.s32.totalorder %s75, %s77
      %p81 = scmp.eq.s32.totalorder %s20, 0
      %p82 = por %p80, %p81
      %p83 = scmp.ne.s32.totalorder %s75, %s77
      %p84 = scmp.eq.s32.totalorder %s25, 1
      %p85 = por %p83, %p84
      %p86 = scmp.ne.s32.totalorder %s77, %s78
      %p87 = scmp.eq.s32.totalorder %s25, 0
      %p88 = por %p86, %p87
      %p89 = scmp.ne.s32.totalorder %s77, %s78
      %p90 = scmp.eq.s32.totalorder %s26, 1
      %p91 = por %p89, %p90
      %p93 = scmp.ne.s32.totalorder %s78, %s92
      %p94 = scmp.eq.s32.totalorder %s26, 0
      %p95 = por %p93, %p94
      %s97 = sadd.s32 %s96, 1
      %p100 = scmp.eq.s32.totalorder %s20, 1
      %p101 = scmp.ne.s32.totalorder %s96, %s98
      %p102 = scmp.eq.s32.totalorder %s20, 0
      %p103 = por %p101, %p102
      %p104 = scmp.ne.s32.totalorder %s96, %s98
      %p105 = scmp.eq.s32.totalorder %s25, 1
      %p106 = por %p104, %p105
      %p107 = scmp.ne.s32.totalorder %s98, %s99
      %p108 = scmp.eq.s32.totalorder %s25, 0
      %p109 = por %p107, %p108
      %p110 = scmp.ne.s32.totalorder %s98, %s99
      %p111 = scmp.eq.s32.totalorder %s26, 1
      %p112 = por %p110, %p111
      %p114 = scmp.ne.s32.totalorder %s99, %s113
      %p115 = scmp.eq.s32.totalorder %s26, 0
      %p116 = por %p114, %p115
      %s118 = sadd.s32 %s117, 1
      %p121 = scmp.eq.s32.totalorder %s20, 1
      %p122 = scmp.ne.s32.totalorder %s117, %s119
      %p123 = scmp.eq.s32.totalorder %s20, 0
      %p124 = por %p122, %p123
      %p125 = scmp.ne.s32.totalorder %s117, %s119
      %p126 = scmp.eq.s32.totalorder %s25, 1
      %p127 = por %p125, %p126
      %p128 = scmp.ne.s32.totalorder %s119, %s120
      %p129 = scmp.eq.s32.totalorder %s25, 0
      %p130 = por %p128, %p129
      %p131 = scmp.ne.s32.totalorder %s119, %s120
      %p132 = scmp.eq.s32.totalorder %s26, 1
      %p133 = por %p131, %p132
      %p135 = scmp.ne.s32.totalorder %s120, %s134
      %p136 = scmp.eq.s32.totalorder %s26, 0
      %p137 = por %p135, %p136
      %s138 = ssub.s32 %s20, %s27
      %p139 = scmp.eq.s32.totalorder %s138, 0
      %s141 = sadd.s32 %s140, 1
      %s142 = scalar_select %p139, %s140, %s141
      %p145 = pneg %p139
      %p146 = scmp.eq.s32.totalorder %s20, 1
      %p147 = por %p145, %p146
      %p148 = scmp.ne.s32.totalorder %s140, %s143
      %p149 = scmp.eq.s32.totalorder %s20, 0
      %p150 = por %p148, %p149
      %p151 = scmp.ne.s32.totalorder %s140, %s143
      %p152 = scmp.eq.s32.totalorder %s25, 1
      %p153 = por %p151, %p152
      %p154 = scmp.ne.s32.totalorder %s143, %s144
      %p155 = scmp.eq.s32.totalorder %s25, 0
      %p156 = por %p154, %p155
      %p157 = scmp.ne.s32.totalorder %s143, %s144
      %p158 = scmp.eq.s32.totalorder %s26, 1
      %p159 = por %p157, %p158
      %p161 = scmp.ne.s32.totalorder %s144, %s160
      %p162 = scmp.eq.s32.totalorder %s26, 0
      %p163 = por %p161, %p162
      %s164 = ssub.s32 %s20, %s27
      %p165 = scmp.eq.s32.totalorder %s164, 0
      %s167 = sadd.s32 %s166, 1
      %s168 = scalar_select %p165, %s166, %s167
      %p171 = pneg %p165
      %p172 = scmp.eq.s32.totalorder %s20, 1
      %p173 = por %p171, %p172
      %p174 = scmp.ne.s32.totalorder %s166, %s169
      %p175 = scmp.eq.s32.totalorder %s20, 0
      %p176 = por %p174, %p175
      %p177 = scmp.ne.s32.totalorder %s166, %s169
      %p178 = scmp.eq.s32.totalorder %s25, 1
      %p179 = por %p177, %p178
      %p180 = scmp.ne.s32.totalorder %s169, %s170
      %p181 = scmp.eq.s32.totalorder %s25, 0
      %p182 = por %p180, %p181
      %p183 = scmp.ne.s32.totalorder %s169, %s170
      %p184 = scmp.eq.s32.totalorder %s26, 1
      %p185 = por %p183, %p184
      %p187 = scmp.ne.s32.totalorder %s170, %s186
      %p188 = scmp.eq.s32.totalorder %s26, 0
      %p189 = por %p187, %p188
      %s190 = ssub.s32 %s20, %s27
      %p191 = scmp.eq.s32.totalorder %s190, 0
      %s193 = sadd.s32 %s192, 1
      %s194 = scalar_select %p191, %s192, %s193
      %p197 = pneg %p191
      %p198 = scmp.eq.s32.totalorder %s20, 1
      %p199 = por %p197, %p198
      %p200 = scmp.ne.s32.totalorder %s192, %s195
      %p201 = scmp.eq.s32.totalorder %s20, 0
      %p202 = por %p200, %p201
      %p203 = scmp.ne.s32.totalorder %s192, %s195
      %p204 = scmp.eq.s32.totalorder %s25, 1
      %p205 = por %p203, %p204
      %p206 = scmp.ne.s32.totalorder %s195, %s196
      %p207 = scmp.eq.s32.totalorder %s25, 0
      %p208 = por %p206, %p207
      %p209 = scmp.ne.s32.totalorder %s195, %s196
      %p210 = scmp.eq.s32.totalorder %s26, 1
      %p211 = por %p209, %p210
      %p213 = scmp.ne.s32.totalorder %s196, %s212
      %p214 = scmp.eq.s32.totalorder %s26, 0
      %p215 = por %p213, %p214
      %p216 = scmp.le.s32.totalorder 1, %s20
      %p217 = scmp.lt.s32.totalorder %s20, 3
      %p218 = pnand %p216, %p217
      %p219 = pneg %p218
      // Predicated region
      $region9: #{tpu_custom_call.1} parent=5 // pred_check
        _
      $region10: #{tpu_custom_call.1} parent=5 // pred_check_branch
        %221 = sbr.rel (%p218) target = $region12
      $region11: #{tpu_custom_call.1} parent=5 // pred_region
        %s222 = ssub.s32 %s20, 1
        // Predicated region
        $region13: #{tpu_custom_call.1} parent=11 // pred_check
          %p223 = pneg %p67
        $region14: #{tpu_custom_call.1} parent=11 // pred_check_branch
          %225 = sbr.rel (%p223) target = $region16
        $region15: #{tpu_custom_call.1} parent=11 // pred_region
          _
        $region16: #{tpu_custom_call.1} parent=11 // pred_fallthru
          _
        // Predicated region
        $region17: #{tpu_custom_call.1} parent=11 // pred_check
          %p226 = pneg %p88
        $region18: #{tpu_custom_call.1} parent=11 // pred_check_branch
          %228 = sbr.rel (%p226) target = $region20
        $region19: #{tpu_custom_call.1} parent=11 // pred_region
          _
        $region20: #{tpu_custom_call.1} parent=11 // pred_fallthru
          _
        // Predicated region
        $region21: #{tpu_custom_call.1} parent=11 // pred_check
          %p229 = pneg %p109
        $region22: #{tpu_custom_call.1} parent=11 // pred_check_branch
          %231 = sbr.rel (%p229) target = $region24
        $region23: #{tpu_custom_call.1} parent=11 // pred_region
          _
        $region24: #{tpu_custom_call.1} parent=11 // pred_fallthru
          _
        // Predicated region
        $region25: #{tpu_custom_call.1} parent=11 // pred_check
          %p232 = pneg %p130
        $region26: #{tpu_custom_call.1} parent=11 // pred_check_branch
          %234 = sbr.rel (%p232) target = $region28
        $region27: #{tpu_custom_call.1} parent=11 // pred_region
          _
        $region28: #{tpu_custom_call.1} parent=11 // pred_fallthru
          _
      $region12: #{tpu_custom_call.1} parent=5 // pred_fallthru
        _
      %p235 = scmp.lt.s32.totalorder %s20, 2
      // Predicated region
      $region29: #{tpu_custom_call.1} parent=5 // pred_check
        %p236 = pneg %p235
      $region30: #{tpu_custom_call.1} parent=5 // pred_check_branch
        %238 = sbr.rel (%p236) target = $region32
      $region31: #{tpu_custom_call.1} parent=5 // pred_region
        // Predicated region
        $region33: #{tpu_custom_call.1} parent=31 // pred_check
          %p239 = pneg %p40
        $region34: #{tpu_custom_call.1} parent=31 // pred_check_branch
          %241 = sbr.rel (%p239) target = $region36
        $region35: #{tpu_custom_call.1} parent=31 // pred_region
          %p242 = scmp.lt.s32.totalorder %s20, 1
          %s243 = scalar_select %p242, %s20, 1
          %s244 = smul.addr %s243, 32
          %s245 = smul.addr %s244, 8
          %s246 = scalar_lea.vmem %s0, %s245
        $region36: #{tpu_custom_call.1} parent=31 // pred_fallthru
          _
      $region32: #{tpu_custom_call.1} parent=5 // pred_fallthru
        _
      %p247 = scmp.le.s32.totalorder 1, %s20
      %p248 = scmp.lt.s32.totalorder %s20, 3
      %p249 = pnand %p247, %p248
      %p250 = pneg %p249
      // Predicated region
      $region37: #{tpu_custom_call.1} parent=5 // pred_check
        _
      $region38: #{tpu_custom_call.1} parent=5 // pred_check_branch
        %252 = sbr.rel (%p249) target = $region40
      $region39: #{tpu_custom_call.1} parent=5 // pred_region
        %s253 = ssub.s32 %s20, 1
        %p254 = scmp.lt.s32.totalorder %s25, 1
        %s255 = scalar_select %p254, %s25, 1
        %s256 = smul.addr %s255, 32
        %s257 = smul.addr %s256, 8
        %s258 = scalar_lea.vmem %s0, %s257
        %p259 = pneg %p46
        %p260 = pneg %p43
        %p261 = pneg %p67
        %p262 = pneg %p64
        %p263 = pneg %p88
        %p264 = pneg %p85
        %p265 = pneg %p109
        %p266 = pneg %p106
        %p267 = pneg %p130
        %p268 = pneg %p127
        %p269 = pneg %p156
        %p270 = pneg %p153
        %p271 = scmp.lt.s32.totalorder %s25, 1
        %s272 = scalar_select %p271, %s25, 1
        %s273 = smul.addr %s272, 32
        %s274 = smul.addr %s273, 8
        %s275 = scalar_lea.vmem %s5, %s274
        %p276 = pneg %p182
        %p277 = pneg %p179
        %s278 = sand.u32 %s169, 1
        %s279 = scalar_lea.sflag [#allocation4], %s278
        %s280 = sand.u32 %s169, 1
        %s281 = scalar_lea.vmem [#allocation3], %s280
        %p282 = pneg %p208
        %p283 = pneg %p205
        %s284 = sand.u32 %s195, 1
        %s285 = scalar_lea.sflag [#allocation6], %s284
        %s286 = sand.u32 %s195, 1
        %s287 = scalar_lea.vmem [#allocation5], %s286
        %p288 = scmp.lt.s32.totalorder %s25, 1
        %s289 = scalar_select %p288, %s25, 1
        %s290 = smul.addr %s289, 32
        %s291 = smul.addr %s290, 8
        %s292 = scalar_lea.vmem %s0, %s291
        %p293 = scmp.lt.s32.totalorder %s25, 1
        %s294 = scalar_select %p293, %s25, 1
        %s295 = smul.addr %s294, 32
        %s296 = smul.addr %s295, 8
        %s297 = scalar_lea.vmem %s5, %s296
        %v299 = vld [vmem:[%s292] sm:$0xff]
        %v300 = vld [vmem:[%s292 + $0x8] sm:$0xff]
        %v301 = vld [vmem:[%s292 + $0x10] sm:$0xff]
        %v302 = vld [vmem:[%s292 + $0x18] sm:$0xff]
        %v303 = vld [vmem:[%s292 + $0x20] sm:$0xff]
        %v304 = vld [vmem:[%s292 + $0x28] sm:$0xff]
        %v305 = vld [vmem:[%s292 + $0x30] sm:$0xff]
        %v306 = vld [vmem:[%s292 + $0x38] sm:$0xff]
        %v307 = vld [vmem:[%s292 + $0x40] sm:$0xff]
        %v308 = vld [vmem:[%s292 + $0x48] sm:$0xff]
        %v309 = vld [vmem:[%s292 + $0x50] sm:$0xff]
        %v310 = vld [vmem:[%s292 + $0x58] sm:$0xff]
        %v311 = vld [vmem:[%s292 + $0x60] sm:$0xff]
        %v312 = vld [vmem:[%s292 + $0x68] sm:$0xff]
        %v313 = vld [vmem:[%s292 + $0x70] sm:$0xff]
        %v314 = vld [vmem:[%s292 + $0x78] sm:$0xff]
        %v315 = vld [vmem:[%s292 + $0x80] sm:$0xff]
        %v316 = vld [vmem:[%s292 + $0x88] sm:$0xff]
        %v317 = vld [vmem:[%s292 + $0x90] sm:$0xff]
        %v318 = vld [vmem:[%s292 + $0x98] sm:$0xff]
        %v319 = vld [vmem:[%s292 + $0xa0] sm:$0xff]
        %v320 = vld [vmem:[%s292 + $0xa8] sm:$0xff]
        %v321 = vld [vmem:[%s292 + $0xb0] sm:$0xff]
        %v322 = vld [vmem:[%s292 + $0xb8] sm:$0xff]
        %v323 = vld [vmem:[%s292 + $0xc0] sm:$0xff]
        %v324 = vld [vmem:[%s292 + $0xc8] sm:$0xff]
        %v325 = vld [vmem:[%s292 + $0xd0] sm:$0xff]
        %v326 = vld [vmem:[%s292 + $0xd8] sm:$0xff]
        %v327 = vld [vmem:[%s292 + $0xe0] sm:$0xff]
        %v328 = vld [vmem:[%s292 + $0xe8] sm:$0xff]
        %v329 = vld [vmem:[%s292 + $0xf0] sm:$0xff]
        %v330 = vld [vmem:[%s292 + $0xf8] sm:$0xff]
        %vm331 = vcmask 31744
        %332 = vst.msk [vmem:[#allocation2] sm:$0xff] %vm331, 0.0
        %333 = vst.msk [vmem:[#allocation2 + $0x8] sm:$0xff] %vm331, 0.0
        %vm334 = vcmask 25600
        %335 = vst.msk [vmem:[#allocation2 + $0x10] sm:$0x3] %vm334, 0.0
        %336 = vst.msk [vmem:[#allocation2 + $0x18] sm:$0xff] %vm331, 0.0
        %337 = vst.msk [vmem:[#allocation2 + $0x20] sm:$0xff] %vm331, 0.0
        %338 = vst.msk [vmem:[#allocation2 + $0x28] sm:$0x3] %vm334, 0.0
        %339 = vst.msk [vmem:[#allocation2 + $0x30] sm:$0xff] %vm331, 0.0
        %340 = vst.msk [vmem:[#allocation2 + $0x38] sm:$0xff] %vm331, 0.0
        %341 = vst.msk [vmem:[#allocation2 + $0x40] sm:$0x3] %vm334, 0.0
        %342 = vst.msk [vmem:[#allocation2 + $0x48] sm:$0xff] %vm331, 0.0
        %343 = vst.msk [vmem:[#allocation2 + $0x50] sm:$0xff] %vm331, 0.0
        %344 = vst.msk [vmem:[#allocation2 + $0x58] sm:$0x3] %vm334, 0.0
        %345 = vst.msk [vmem:[#allocation2 + $0x60] sm:$0xff] %vm331, 0.0
        %346 = vst.msk [vmem:[#allocation2 + $0x68] sm:$0xff] %vm331, 0.0
        %347 = vst.msk [vmem:[#allocation2 + $0x70] sm:$0x3] %vm334, 0.0
        %348 = vst.msk [vmem:[#allocation2 + $0x78] sm:$0xff] %vm331, 0.0
        %349 = vst.msk [vmem:[#allocation2 + $0x80] sm:$0xff] %vm331, 0.0
        %350 = vst.msk [vmem:[#allocation2 + $0x88] sm:$0x3] %vm334, 0.0
        %351 = vst.msk [vmem:[#allocation2 + $0x90] sm:$0xff] %vm331, 0.0
        %352 = vst.msk [vmem:[#allocation2 + $0x98] sm:$0xff] %vm331, 0.0
        %353 = vst.msk [vmem:[#allocation2 + $0xa0] sm:$0x3] %vm334, 0.0
        %354 = vst.msk [vmem:[#allocation2 + $0xa8] sm:$0xff] %vm331, 0.0
        %355 = vst.msk [vmem:[#allocation2 + $0xb0] sm:$0xff] %vm331, 0.0
        %356 = vst.msk [vmem:[#allocation2 + $0xb8] sm:$0x3] %vm334, 0.0
        %357 = vst.msk [vmem:[#allocation2 + $0xc0] sm:$0xff] %vm331, 0.0
        %358 = vst.msk [vmem:[#allocation2 + $0xc8] sm:$0xff] %vm331, 0.0
        %359 = vst.msk [vmem:[#allocation2 + $0xd0] sm:$0x3] %vm334, 0.0
        %360 = vst.msk [vmem:[#allocation2 + $0xd8] sm:$0xff] %vm331, 0.0
        %361 = vst.msk [vmem:[#allocation2 + $0xe0] sm:$0xff] %vm331, 0.0
        %362 = vst.msk [vmem:[#allocation2 + $0xe8] sm:$0x3] %vm334, 0.0
        %363 = vst.msk [vmem:[#allocation2 + $0xf0] sm:$0xff] %vm331, 0.0
        %364 = vst.msk [vmem:[#allocation2 + $0xf8] sm:$0xff] %vm331, 0.0
        %365 = vst.msk [vmem:[#allocation2 + $0x100] sm:$0x3] %vm334, 0.0
        %366 = vst.msk [vmem:[#allocation2 + $0x108] sm:$0xff] %vm331, 0.0
        %367 = vst.msk [vmem:[#allocation2 + $0x110] sm:$0xff] %vm331, 0.0
        %368 = vst.msk [vmem:[#allocation2 + $0x118] sm:$0x3] %vm334, 0.0
        %369 = vst.msk [vmem:[#allocation2 + $0x120] sm:$0xff] %vm331, 0.0
        %370 = vst.msk [vmem:[#allocation2 + $0x128] sm:$0xff] %vm331, 0.0
        %371 = vst.msk [vmem:[#allocation2 + $0x130] sm:$0x3] %vm334, 0.0
        %372 = vst.msk [vmem:[#allocation2 + $0x138] sm:$0xff] %vm331, 0.0
        %373 = vst.msk [vmem:[#allocation2 + $0x140] sm:$0xff] %vm331, 0.0
        %374 = vst.msk [vmem:[#allocation2 + $0x148] sm:$0x3] %vm334, 0.0
        %375 = vst.msk [vmem:[#allocation2 + $0x150] sm:$0xff] %vm331, 0.0
        %376 = vst.msk [vmem:[#allocation2 + $0x158] sm:$0xff] %vm331, 0.0
        %377 = vst.msk [vmem:[#allocation2 + $0x160] sm:$0x3] %vm334, 0.0
        %378 = vst.msk [vmem:[#allocation2 + $0x168] sm:$0xff] %vm331, 0.0
        %379 = vst.msk [vmem:[#allocation2 + $0x170] sm:$0xff] %vm331, 0.0
        %380 = vst.msk [vmem:[#allocation2 + $0x178] sm:$0x3] %vm334, 0.0
        %381 = vst.msk [vmem:[#allocation2 + $0x180] sm:$0xff] %vm331, 0.0
        %382 = vst.msk [vmem:[#allocation2 + $0x188] sm:$0xff] %vm331, 0.0
        %383 = vst.msk [vmem:[#allocation2 + $0x190] sm:$0x3] %vm334, 0.0
        %384 = vst.msk [vmem:[#allocation2 + $0x198] sm:$0xff] %vm331, 0.0
        %385 = vst.msk [vmem:[#allocation2 + $0x1a0] sm:$0xff] %vm331, 0.0
        %386 = vst.msk [vmem:[#allocation2 + $0x1a8] sm:$0x3] %vm334, 0.0
        %s387 = scalar_lea.vmem [#allocation2], 24
        %388 = vst.msk [vmem:[%s387 + $0x1] sm:$0xff] %vm331, %v299
        %389 = vst.msk [vmem:[%s387 + $0x9] sm:$0xff] %vm331, %v300
        %390 = vst.msk [vmem:[%s387 + $0x19] sm:$0xff] %vm331, %v301
        %391 = vst.msk [vmem:[%s387 + $0x21] sm:$0xff] %vm331, %v302
        %392 = vst.msk [vmem:[%s387 + $0x31] sm:$0xff] %vm331, %v303
        %393 = vst.msk [vmem:[%s387 + $0x39] sm:$0xff] %vm331, %v304
        %394 = vst.msk [vmem:[%s387 + $0x49] sm:$0xff] %vm331, %v305
        %395 = vst.msk [vmem:[%s387 + $0x51] sm:$0xff] %vm331, %v306
        %396 = vst.msk [vmem:[%s387 + $0x61] sm:$0xff] %vm331, %v307
        %397 = vst.msk [vmem:[%s387 + $0x69] sm:$0xff] %vm331, %v308
        %398 = vst.msk [vmem:[%s387 + $0x79] sm:$0xff] %vm331, %v309
        %399 = vst.msk [vmem:[%s387 + $0x81] sm:$0xff] %vm331, %v310
        %400 = vst.msk [vmem:[%s387 + $0x91] sm:$0xff] %vm331, %v311
        %401 = vst.msk [vmem:[%s387 + $0x99] sm:$0xff] %vm331, %v312
        %402 = vst.msk [vmem:[%s387 + $0xa9] sm:$0xff] %vm331, %v313
        %403 = vst.msk [vmem:[%s387 + $0xb1] sm:$0xff] %vm331, %v314
        %404 = vst.msk [vmem:[%s387 + $0xc1] sm:$0xff] %vm331, %v315
        %405 = vst.msk [vmem:[%s387 + $0xc9] sm:$0xff] %vm331, %v316
        %406 = vst.msk [vmem:[%s387 + $0xd9] sm:$0xff] %vm331, %v317
        %407 = vst.msk [vmem:[%s387 + $0xe1] sm:$0xff] %vm331, %v318
        %408 = vst.msk [vmem:[%s387 + $0xf1] sm:$0xff] %vm331, %v319
        %409 = vst.msk [vmem:[%s387 + $0xf9] sm:$0xff] %vm331, %v320
        %410 = vst.msk [vmem:[%s387 + $0x109] sm:$0xff] %vm331, %v321
        %411 = vst.msk [vmem:[%s387 + $0x111] sm:$0xff] %vm331, %v322
        %412 = vst.msk [vmem:[%s387 + $0x121] sm:$0xff] %vm331, %v323
        %413 = vst.msk [vmem:[%s387 + $0x129] sm:$0xff] %vm331, %v324
        %414 = vst.msk [vmem:[%s387 + $0x139] sm:$0xff] %vm331, %v325
        %415 = vst.msk [vmem:[%s387 + $0x141] sm:$0xff] %vm331, %v326
        %416 = vst.msk [vmem:[%s387 + $0x151] sm:$0xff] %vm331, %v327
        %417 = vst.msk [vmem:[%s387 + $0x159] sm:$0xff] %vm331, %v328
        %418 = vst.msk [vmem:[%s387 + $0x169] sm:$0xff] %vm331, %v329
        %419 = vst.msk [vmem:[%s387 + $0x171] sm:$0xff] %vm331, %v330
        %v420 = vld [vmem:[#allocation2] sm:$0xff]
        %v421 = vld [vmem:[#allocation2 + $0x8] sm:$0xff]
        %v422 = vld [vmem:[#allocation2 + $0x18] sm:$0xff]
        %v423 = vld [vmem:[#allocation2 + $0x20] sm:$0xff]
        %v424 = vld [vmem:[#allocation2 + $0x30] sm:$0xff]
        %v425 = vld [vmem:[#allocation2 + $0x38] sm:$0xff]
        %v426 = vld [vmem:[#allocation2 + $0x48] sm:$0xff]
        %v427 = vld [vmem:[#allocation2 + $0x50] sm:$0xff]
        %v428 = vld [vmem:[#allocation2 + $0x60] sm:$0xff]
        %v429 = vld [vmem:[#allocation2 + $0x68] sm:$0xff]
        %v430 = vld [vmem:[#allocation2 + $0x78] sm:$0xff]
        %v431 = vld [vmem:[#allocation2 + $0x80] sm:$0xff]
        %v432 = vld [vmem:[#allocation2 + $0x90] sm:$0xff]
        %v433 = vld [vmem:[#allocation2 + $0x98] sm:$0xff]
        %v434 = vld [vmem:[#allocation2 + $0xa8] sm:$0xff]
        %v435 = vld [vmem:[#allocation2 + $0xb0] sm:$0xff]
        %v436 = vld [vmem:[#allocation2 + $0xc0] sm:$0xff]
        %v437 = vld [vmem:[#allocation2 + $0xc8] sm:$0xff]
        %v438 = vld [vmem:[#allocation2 + $0xd8] sm:$0xff]
        %v439 = vld [vmem:[#allocation2 + $0xe0] sm:$0xff]
        %v440 = vld [vmem:[#allocation2 + $0xf0] sm:$0xff]
        %v441 = vld [vmem:[#allocation2 + $0xf8] sm:$0xff]
        %v442 = vld [vmem:[#allocation2 + $0x108] sm:$0xff]
        %v443 = vld [vmem:[#allocation2 + $0x110] sm:$0xff]
        %v444 = vld [vmem:[#allocation2 + $0x120] sm:$0xff]
        %v445 = vld [vmem:[#allocation2 + $0x128] sm:$0xff]
        %v446 = vld [vmem:[#allocation2 + $0x138] sm:$0xff]
        %v447 = vld [vmem:[#allocation2 + $0x140] sm:$0xff]
        %v448 = vld [vmem:[#allocation2 + $0x150] sm:$0xff]
        %v449 = vld [vmem:[#allocation2 + $0x158] sm:$0xff]
        %v450 = vld [vmem:[#allocation2 + $0x168] sm:$0xff]
        %v451 = vld [vmem:[#allocation2 + $0x170] sm:$0xff]
        %v452 = vpack.c.bf16 %v421, %v420
        %v453 = vpack.c.bf16 %v423, %v422
        %v454 = vpack.c.bf16 %v425, %v424
        %v455 = vpack.c.bf16 %v427, %v426
        %v456 = vpack.c.bf16 %v429, %v428
        %v457 = vpack.c.bf16 %v431, %v430
        %v458 = vpack.c.bf16 %v433, %v432
        %v459 = vpack.c.bf16 %v435, %v434
        %v460 = vpack.c.bf16 %v437, %v436
        %v461 = vpack.c.bf16 %v439, %v438
        %v462 = vpack.c.bf16 %v441, %v440
        %v463 = vpack.c.bf16 %v443, %v442
        %v464 = vpack.c.bf16 %v445, %v444
        %v465 = vpack.c.bf16 %v447, %v446
        %v466 = vpack.c.bf16 %v449, %v448
        %v467 = vpack.c.bf16 %v451, %v450
        %v468 = vld [vmem:[%s3] sm:$0x3]
        %v469 = vld [vmem:[#allocation2 + $0x1] sm:$0xff]
        %v470 = vld [vmem:[#allocation2 + $0x9] sm:$0xff]
        %v471 = vld [vmem:[#allocation2 + $0x19] sm:$0xff]
        %v472 = vld [vmem:[#allocation2 + $0x21] sm:$0xff]
        %v473 = vld [vmem:[#allocation2 + $0x31] sm:$0xff]
        %v474 = vld [vmem:[#allocation2 + $0x39] sm:$0xff]
        %v475 = vld [vmem:[#allocation2 + $0x49] sm:$0xff]
        %v476 = vld [vmem:[#allocation2 + $0x51] sm:$0xff]
        %v477 = vld [vmem:[#allocation2 + $0x61] sm:$0xff]
        %v478 = vld [vmem:[#allocation2 + $0x69] sm:$0xff]
        %v479 = vld [vmem:[#allocation2 + $0x79] sm:$0xff]
        %v480 = vld [vmem:[#allocation2 + $0x81] sm:$0xff]
        %v481 = vld [vmem:[#allocation2 + $0x91] sm:$0xff]
        %v482 = vld [vmem:[#allocation2 + $0x99] sm:$0xff]
        %v483 = vld [vmem:[#allocation2 + $0xa9] sm:$0xff]
        %v484 = vld [vmem:[#allocation2 + $0xb1] sm:$0xff]
        %v485 = vld [vmem:[#allocation2 + $0xc1] sm:$0xff]
        %v486 = vld [vmem:[#allocation2 + $0xc9] sm:$0xff]
        %v487 = vld [vmem:[#allocation2 + $0xd9] sm:$0xff]
        %v488 = vld [vmem:[#allocation2 + $0xe1] sm:$0xff]
        %v489 = vld [vmem:[#allocation2 + $0xf1] sm:$0xff]
        %v490 = vld [vmem:[#allocation2 + $0xf9] sm:$0xff]
        %v491 = vld [vmem:[#allocation2 + $0x109] sm:$0xff]
        %v492 = vld [vmem:[#allocation2 + $0x111] sm:$0xff]
        %v493 = vld [vmem:[#allocation2 + $0x121] sm:$0xff]
        %v494 = vld [vmem:[#allocation2 + $0x129] sm:$0xff]
        %v495 = vld [vmem:[#allocation2 + $0x139] sm:$0xff]
        %v496 = vld [vmem:[#allocation2 + $0x141] sm:$0xff]
        %v497 = vld [vmem:[#allocation2 + $0x151] sm:$0xff]
        %v498 = vld [vmem:[#allocation2 + $0x159] sm:$0xff]
        %v499 = vld [vmem:[#allocation2 + $0x169] sm:$0xff]
        %v500 = vld [vmem:[#allocation2 + $0x171] sm:$0xff]
        %v501 = vpack.c.bf16 %v470, %v469
        %v502 = vpack.c.bf16 %v472, %v471
        %v503 = vpack.c.bf16 %v474, %v473
        %v504 = vpack.c.bf16 %v476, %v475
        %v505 = vpack.c.bf16 %v478, %v477
        %v506 = vpack.c.bf16 %v480, %v479
        %v507 = vpack.c.bf16 %v482, %v481
        %v508 = vpack.c.bf16 %v484, %v483
        %v509 = vpack.c.bf16 %v486, %v485
        %v510 = vpack.c.bf16 %v488, %v487
        %v511 = vpack.c.bf16 %v490, %v489
        %v512 = vpack.c.bf16 %v492, %v491
        %v513 = vpack.c.bf16 %v494, %v493
        %v514 = vpack.c.bf16 %v496, %v495
        %v515 = vpack.c.bf16 %v498, %v497
        %v516 = vpack.c.bf16 %v500, %v499
        %s517 = scalar_lea.vmem %s3, 2
        %v518 = vld [vmem:[%s517] sm:$0x3]
        %v520 = vsel %vm331, %v501, 0
        %v523 = vsel %vm331, %v502, 0
        %v526 = vsel %vm331, %v503, 0
        %v529 = vsel %vm331, %v504, 0
        %v532 = vsel %vm331, %v505, 0
        %v535 = vsel %vm331, %v506, 0
        %v538 = vsel %vm331, %v507, 0
        %v541 = vsel %vm331, %v508, 0
        %v544 = vsel %vm331, %v509, 0
        %v547 = vsel %vm331, %v510, 0
        %v550 = vsel %vm331, %v511, 0
        %v553 = vsel %vm331, %v512, 0
        %v556 = vsel %vm331, %v513, 0
        %v559 = vsel %vm331, %v514, 0
        %v562 = vsel %vm331, %v515, 0
        %v565 = vsel %vm331, %v516, 0
        %vm567 = vcmask 1041408
        %v569 = vsel %vm567, %v518, 0
        %571 = vmatpush.bf16.msra.mxu0 0
        %572 = vmatpush.bf16.msra.mxu0 0
        %573 = vmatpush.bf16.msra.mxu0 0
        %574 = vmatpush.bf16.msra.mxu0 0
        %575 = vmatpush.bf16.msra.mxu0 0
        %576 = vmatpush.bf16.msra.mxu0 0
        %577 = vmatpush.bf16.msra.mxu0 0
        %578 = vmatpush.bf16.msra.mxu0 %v569
        %579 = vmatmul.bf16.gmra.mxu0 %v520
        %v580 = vpop.f32.mrf.mxu0
        %v581 = vadd.f32 0.0, %v580
        %v582 = vpop.f32.mrf.mxu0
        %v583 = vadd.f32 0.0, %v582
        %584 = vmatmul.bf16.gmra.mxu0 %v523
        %v585 = vpop.f32.mrf.mxu0
        %v586 = vadd.f32 0.0, %v585
        %v587 = vpop.f32.mrf.mxu0
        %v588 = vadd.f32 0.0, %v587
        %589 = vmatmul.bf16.gmra.mxu0 %v526
        %v590 = vpop.f32.mrf.mxu0
        %v591 = vadd.f32 0.0, %v590
        %v592 = vpop.f32.mrf.mxu0
        %v593 = vadd.f32 0.0, %v592
        %594 = vmatmul.bf16.gmra.mxu0 %v529
        %v595 = vpop.f32.mrf.mxu0
        %v596 = vadd.f32 0.0, %v595
        %v597 = vpop.f32.mrf.mxu0
        %v598 = vadd.f32 0.0, %v597
        %599 = vmatmul.bf16.gmra.mxu0 %v532
        %v600 = vpop.f32.mrf.mxu0
        %v601 = vadd.f32 0.0, %v600
        %v602 = vpop.f32.mrf.mxu0
        %v603 = vadd.f32 0.0, %v602
        %604 = vmatmul.bf16.gmra.mxu0 %v535
        %v605 = vpop.f32.mrf.mxu0
        %v606 = vadd.f32 0.0, %v605
        %v607 = vpop.f32.mrf.mxu0
        %v608 = vadd.f32 0.0, %v607
        %609 = vmatmul.bf16.gmra.mxu0 %v538
        %v610 = vpop.f32.mrf.mxu0
        %v611 = vadd.f32 0.0, %v610
        %v612 = vpop.f32.mrf.mxu0
        %v613 = vadd.f32 0.0, %v612
        %614 = vmatmul.bf16.gmra.mxu0 %v541
        %v615 = vpop.f32.mrf.mxu0
        %v616 = vadd.f32 0.0, %v615
        %v617 = vpop.f32.mrf.mxu0
        %v618 = vadd.f32 0.0, %v617
        %619 = vmatmul.bf16.gmra.mxu0 %v544
        %v620 = vpop.f32.mrf.mxu0
        %v621 = vadd.f32 0.0, %v620
        %v622 = vpop.f32.mrf.mxu0
        %v623 = vadd.f32 0.0, %v622
        %624 = vmatmul.bf16.gmra.mxu0 %v547
        %v625 = vpop.f32.mrf.mxu0
        %v626 = vadd.f32 0.0, %v625
        %v627 = vpop.f32.mrf.mxu0
        %v628 = vadd.f32 0.0, %v627
        %629 = vmatmul.bf16.gmra.mxu0 %v550
        %v630 = vpop.f32.mrf.mxu0
        %v631 = vadd.f32 0.0, %v630
        %v632 = vpop.f32.mrf.mxu0
        %v633 = vadd.f32 0.0, %v632
        %634 = vmatmul.bf16.gmra.mxu0 %v553
        %v635 = vpop.f32.mrf.mxu0
        %v636 = vadd.f32 0.0, %v635
        %v637 = vpop.f32.mrf.mxu0
        %v638 = vadd.f32 0.0, %v637
        %639 = vmatmul.bf16.gmra.mxu0 %v556
        %v640 = vpop.f32.mrf.mxu0
        %v641 = vadd.f32 0.0, %v640
        %v642 = vpop.f32.mrf.mxu0
        %v643 = vadd.f32 0.0, %v642
        %644 = vmatmul.bf16.gmra.mxu0 %v559
        %v645 = vpop.f32.mrf.mxu0
        %v646 = vadd.f32 0.0, %v645
        %v647 = vpop.f32.mrf.mxu0
        %v648 = vadd.f32 0.0, %v647
        %649 = vmatmul.bf16.gmra.mxu0 %v562
        %v650 = vpop.f32.mrf.mxu0
        %v651 = vadd.f32 0.0, %v650
        %v652 = vpop.f32.mrf.mxu0
        %v653 = vadd.f32 0.0, %v652
        %654 = vmatmul.bf16.gmra.mxu0 %v565
        %v655 = vpop.f32.mrf.mxu0
        %v656 = vadd.f32 0.0, %v655
        %v657 = vpop.f32.mrf.mxu0
        %v658 = vadd.f32 0.0, %v657
        %659 = vdwg.mxu0
        %v661 = vsel %vm331, %v452, 0
        %v664 = vsel %vm331, %v453, 0
        %v667 = vsel %vm331, %v454, 0
        %v670 = vsel %vm331, %v455, 0
        %v673 = vsel %vm331, %v456, 0
        %v676 = vsel %vm331, %v457, 0
        %v679 = vsel %vm331, %v458, 0
        %v682 = vsel %vm331, %v459, 0
        %v685 = vsel %vm331, %v460, 0
        %v688 = vsel %vm331, %v461, 0
        %v691 = vsel %vm331, %v462, 0
        %v694 = vsel %vm331, %v463, 0
        %v697 = vsel %vm331, %v464, 0
        %v700 = vsel %vm331, %v465, 0
        %v703 = vsel %vm331, %v466, 0
        %v706 = vsel %vm331, %v467, 0
        %v709 = vsel %vm567, %v468, 0
        %711 = vmatpush.bf16.msra.mxu0 0
        %712 = vmatpush.bf16.msra.mxu0 0
        %713 = vmatpush.bf16.msra.mxu0 0
        %714 = vmatpush.bf16.msra.mxu0 0
        %715 = vmatpush.bf16.msra.mxu0 0
        %716 = vmatpush.bf16.msra.mxu0 0
        %717 = vmatpush.bf16.msra.mxu0 0
        %718 = vmatpush.bf16.msra.mxu0 %v709
        %719 = vmatmul.bf16.gmra.mxu0 %v661
        %v720 = vpop.f32.mrf.mxu0
        %v721 = vadd.f32 %v581, %v720
        %v722 = vpop.f32.mrf.mxu0
        %v723 = vadd.f32 %v583, %v722
        %724 = vmatmul.bf16.gmra.mxu0 %v664
        %v725 = vpop.f32.mrf.mxu0
        %v726 = vadd.f32 %v586, %v725
        %v727 = vpop.f32.mrf.mxu0
        %v728 = vadd.f32 %v588, %v727
        %729 = vmatmul.bf16.gmra.mxu0 %v667
        %v730 = vpop.f32.mrf.mxu0
        %v731 = vadd.f32 %v591, %v730
        %v732 = vpop.f32.mrf.mxu0
        %v733 = vadd.f32 %v593, %v732
        %734 = vmatmul.bf16.gmra.mxu0 %v670
        %v735 = vpop.f32.mrf.mxu0
        %v736 = vadd.f32 %v596, %v735
        %v737 = vpop.f32.mrf.mxu0
        %v738 = vadd.f32 %v598, %v737
        %739 = vmatmul.bf16.gmra.mxu0 %v673
        %v740 = vpop.f32.mrf.mxu0
        %v741 = vadd.f32 %v601, %v740
        %v742 = vpop.f32.mrf.mxu0
        %v743 = vadd.f32 %v603, %v742
        %744 = vmatmul.bf16.gmra.mxu0 %v676
        %v745 = vpop.f32.mrf.mxu0
        %v746 = vadd.f32 %v606, %v745
        %v747 = vpop.f32.mrf.mxu0
        %v748 = vadd.f32 %v608, %v747
        %749 = vmatmul.bf16.gmra.mxu0 %v679
        %v750 = vpop.f32.mrf.mxu0
        %v751 = vadd.f32 %v611, %v750
        %v752 = vpop.f32.mrf.mxu0
        %v753 = vadd.f32 %v613, %v752
        %754 = vmatmul.bf16.gmra.mxu0 %v682
        %v755 = vpop.f32.mrf.mxu0
        %v756 = vadd.f32 %v616, %v755
        %v757 = vpop.f32.mrf.mxu0
        %v758 = vadd.f32 %v618, %v757
        %759 = vmatmul.bf16.gmra.mxu0 %v685
        %v760 = vpop.f32.mrf.mxu0
        %v761 = vadd.f32 %v621, %v760
        %v762 = vpop.f32.mrf.mxu0
        %v763 = vadd.f32 %v623, %v762
        %764 = vmatmul.bf16.gmra.mxu0 %v688
        %v765 = vpop.f32.mrf.mxu0
        %v766 = vadd.f32 %v626, %v765
        %v767 = vpop.f32.mrf.mxu0
        %v768 = vadd.f32 %v628, %v767
        %769 = vmatmul.bf16.gmra.mxu0 %v691
        %v770 = vpop.f32.mrf.mxu0
        %v771 = vadd.f32 %v631, %v770
        %v772 = vpop.f32.mrf.mxu0
        %v773 = vadd.f32 %v633, %v772
        %774 = vmatmul.bf16.gmra.mxu0 %v694
        %v775 = vpop.f32.mrf.mxu0
        %v776 = vadd.f32 %v636, %v775
        %v777 = vpop.f32.mrf.mxu0
        %v778 = vadd.f32 %v638, %v777
        %779 = vmatmul.bf16.gmra.mxu0 %v697
        %v780 = vpop.f32.mrf.mxu0
        %v781 = vadd.f32 %v641, %v780
        %v782 = vpop.f32.mrf.mxu0
        %v783 = vadd.f32 %v643, %v782
        %784 = vmatmul.bf16.gmra.mxu0 %v700
        %v785 = vpop.f32.mrf.mxu0
        %v786 = vadd.f32 %v646, %v785
        %v787 = vpop.f32.mrf.mxu0
        %v788 = vadd.f32 %v648, %v787
        %789 = vmatmul.bf16.gmra.mxu0 %v703
        %v790 = vpop.f32.mrf.mxu0
        %v791 = vadd.f32 %v651, %v790
        %v792 = vpop.f32.mrf.mxu0
        %v793 = vadd.f32 %v653, %v792
        %794 = vmatmul.bf16.gmra.mxu0 %v706
        %v795 = vpop.f32.mrf.mxu0
        %v796 = vadd.f32 %v656, %v795
        %v797 = vpop.f32.mrf.mxu0
        %v798 = vadd.f32 %v658, %v797
        %799 = vdwg.mxu0
        %v800 = vld [vmem:[#allocation2 + $0x2] sm:$0xff]
        %v801 = vld [vmem:[#allocation2 + $0xa] sm:$0xff]
        %v802 = vld [vmem:[#allocation2 + $0x1a] sm:$0xff]
        %v803 = vld [vmem:[#allocation2 + $0x22] sm:$0xff]
        %v804 = vld [vmem:[#allocation2 + $0x32] sm:$0xff]
        %v805 = vld [vmem:[#allocation2 + $0x3a] sm:$0xff]
        %v806 = vld [vmem:[#allocation2 + $0x4a] sm:$0xff]
        %v807 = vld [vmem:[#allocation2 + $0x52] sm:$0xff]
        %v808 = vld [vmem:[#allocation2 + $0x62] sm:$0xff]
        %v809 = vld [vmem:[#allocation2 + $0x6a] sm:$0xff]
        %v810 = vld [vmem:[#allocation2 + $0x7a] sm:$0xff]
        %v811 = vld [vmem:[#allocation2 + $0x82] sm:$0xff]
        %v812 = vld [vmem:[#allocation2 + $0x92] sm:$0xff]
        %v813 = vld [vmem:[#allocation2 + $0x9a] sm:$0xff]
        %v814 = vld [vmem:[#allocation2 + $0xaa] sm:$0xff]
        %v815 = vld [vmem:[#allocation2 + $0xb2] sm:$0xff]
        %v816 = vld [vmem:[#allocation2 + $0xc2] sm:$0xff]
        %v817 = vld [vmem:[#allocation2 + $0xca] sm:$0xff]
        %v818 = vld [vmem:[#allocation2 + $0xda] sm:$0xff]
        %v819 = vld [vmem:[#allocation2 + $0xe2] sm:$0xff]
        %v820 = vld [vmem:[#allocation2 + $0xf2] sm:$0xff]
        %v821 = vld [vmem:[#allocation2 + $0xfa] sm:$0xff]
        %v822 = vld [vmem:[#allocation2 + $0x10a] sm:$0xff]
        %v823 = vld [vmem:[#allocation2 + $0x112] sm:$0xff]
        %v824 = vld [vmem:[#allocation2 + $0x122] sm:$0xff]
        %v825 = vld [vmem:[#allocation2 + $0x12a] sm:$0xff]
        %v826 = vld [vmem:[#allocation2 + $0x13a] sm:$0xff]
        %v827 = vld [vmem:[#allocation2 + $0x142] sm:$0xff]
        %v828 = vld [vmem:[#allocation2 + $0x152] sm:$0xff]
        %v829 = vld [vmem:[#allocation2 + $0x15a] sm:$0xff]
        %v830 = vld [vmem:[#allocation2 + $0x16a] sm:$0xff]
        %v831 = vld [vmem:[#allocation2 + $0x172] sm:$0xff]
        %v832 = vpack.c.bf16 %v801, %v800
        %v833 = vpack.c.bf16 %v803, %v802
        %v834 = vpack.c.bf16 %v805, %v804
        %v835 = vpack.c.bf16 %v807, %v806
        %v836 = vpack.c.bf16 %v809, %v808
        %v837 = vpack.c.bf16 %v811, %v810
        %v838 = vpack.c.bf16 %v813, %v812
        %v839 = vpack.c.bf16 %v815, %v814
        %v840 = vpack.c.bf16 %v817, %v816
        %v841 = vpack.c.bf16 %v819, %v818
        %v842 = vpack.c.bf16 %v821, %v820
        %v843 = vpack.c.bf16 %v823, %v822
        %v844 = vpack.c.bf16 %v825, %v824
        %v845 = vpack.c.bf16 %v827, %v826
        %v846 = vpack.c.bf16 %v829, %v828
        %v847 = vpack.c.bf16 %v831, %v830
        %s848 = scalar_lea.vmem %s3, 4
        %v849 = vld [vmem:[%s848] sm:$0x3]
        %v851 = vsel %vm331, %v832, 0
        %v854 = vsel %vm331, %v833, 0
        %v857 = vsel %vm331, %v834, 0
        %v860 = vsel %vm331, %v835, 0
        %v863 = vsel %vm331, %v836, 0
        %v866 = vsel %vm331, %v837, 0
        %v869 = vsel %vm331, %v838, 0
        %v872 = vsel %vm331, %v839, 0
        %v875 = vsel %vm331, %v840, 0
        %v878 = vsel %vm331, %v841, 0
        %v881 = vsel %vm331, %v842, 0
        %v884 = vsel %vm331, %v843, 0
        %v887 = vsel %vm331, %v844, 0
        %v890 = vsel %vm331, %v845, 0
        %v893 = vsel %vm331, %v846, 0
        %v896 = vsel %vm331, %v847, 0
        %v899 = vsel %vm567, %v849, 0
        %901 = vmatpush.bf16.msra.mxu0 0
        %902 = vmatpush.bf16.msra.mxu0 0
        %903 = vmatpush.bf16.msra.mxu0 0
        %904 = vmatpush.bf16.msra.mxu0 0
        %905 = vmatpush.bf16.msra.mxu0 0
        %906 = vmatpush.bf16.msra.mxu0 0
        %907 = vmatpush.bf16.msra.mxu0 0
        %908 = vmatpush.bf16.msra.mxu0 %v899
        %909 = vmatmul.bf16.gmra.mxu0 %v851
        %v910 = vpop.f32.mrf.mxu0
        %v911 = vadd.f32 0.0, %v910
        %v912 = vpop.f32.mrf.mxu0
        %v913 = vadd.f32 0.0, %v912
        %914 = vmatmul.bf16.gmra.mxu0 %v854
        %v915 = vpop.f32.mrf.mxu0
        %v916 = vadd.f32 0.0, %v915
        %v917 = vpop.f32.mrf.mxu0
        %v918 = vadd.f32 0.0, %v917
        %919 = vmatmul.bf16.gmra.mxu0 %v857
        %v920 = vpop.f32.mrf.mxu0
        %v921 = vadd.f32 0.0, %v920
        %v922 = vpop.f32.mrf.mxu0
        %v923 = vadd.f32 0.0, %v922
        %924 = vmatmul.bf16.gmra.mxu0 %v860
        %v925 = vpop.f32.mrf.mxu0
        %v926 = vadd.f32 0.0, %v925
        %v927 = vpop.f32.mrf.mxu0
        %v928 = vadd.f32 0.0, %v927
        %929 = vmatmul.bf16.gmra.mxu0 %v863
        %v930 = vpop.f32.mrf.mxu0
        %v931 = vadd.f32 0.0, %v930
        %v932 = vpop.f32.mrf.mxu0
        %v933 = vadd.f32 0.0, %v932
        %934 = vmatmul.bf16.gmra.mxu0 %v866
        %v935 = vpop.f32.mrf.mxu0
        %v936 = vadd.f32 0.0, %v935
        %v937 = vpop.f32.mrf.mxu0
        %v938 = vadd.f32 0.0, %v937
        %939 = vmatmul.bf16.gmra.mxu0 %v869
        %v940 = vpop.f32.mrf.mxu0
        %v941 = vadd.f32 0.0, %v940
        %v942 = vpop.f32.mrf.mxu0
        %v943 = vadd.f32 0.0, %v942
        %944 = vmatmul.bf16.gmra.mxu0 %v872
        %v945 = vpop.f32.mrf.mxu0
        %v946 = vadd.f32 0.0, %v945
        %v947 = vpop.f32.mrf.mxu0
        %v948 = vadd.f32 0.0, %v947
        %949 = vmatmul.bf16.gmra.mxu0 %v875
        %v950 = vpop.f32.mrf.mxu0
        %v951 = vadd.f32 0.0, %v950
        %v952 = vpop.f32.mrf.mxu0
        %v953 = vadd.f32 0.0, %v952
        %954 = vmatmul.bf16.gmra.mxu0 %v878
        %v955 = vpop.f32.mrf.mxu0
        %v956 = vadd.f32 0.0, %v955
        %v957 = vpop.f32.mrf.mxu0
        %v958 = vadd.f32 0.0, %v957
        %959 = vmatmul.bf16.gmra.mxu0 %v881
        %v960 = vpop.f32.mrf.mxu0
        %v961 = vadd.f32 0.0, %v960
        %v962 = vpop.f32.mrf.mxu0
        %v963 = vadd.f32 0.0, %v962
        %964 = vmatmul.bf16.gmra.mxu0 %v884
        %v965 = vpop.f32.mrf.mxu0
        %v966 = vadd.f32 0.0, %v965
        %v967 = vpop.f32.mrf.mxu0
        %v968 = vadd.f32 0.0, %v967
        %969 = vmatmul.bf16.gmra.mxu0 %v887
        %v970 = vpop.f32.mrf.mxu0
        %v971 = vadd.f32 0.0, %v970
        %v972 = vpop.f32.mrf.mxu0
        %v973 = vadd.f32 0.0, %v972
        %974 = vmatmul.bf16.gmra.mxu0 %v890
        %v975 = vpop.f32.mrf.mxu0
        %v976 = vadd.f32 0.0, %v975
        %v977 = vpop.f32.mrf.mxu0
        %v978 = vadd.f32 0.0, %v977
        %979 = vmatmul.bf16.gmra.mxu0 %v893
        %v980 = vpop.f32.mrf.mxu0
        %v981 = vadd.f32 0.0, %v980
        %v982 = vpop.f32.mrf.mxu0
        %v983 = vadd.f32 0.0, %v982
        %984 = vmatmul.bf16.gmra.mxu0 %v896
        %v985 = vpop.f32.mrf.mxu0
        %v986 = vadd.f32 0.0, %v985
        %v987 = vpop.f32.mrf.mxu0
        %v988 = vadd.f32 0.0, %v987
        %989 = vdwg.mxu0
        %v990 = vadd.f32 %v721, %v911
        %v991 = vadd.f32 %v723, %v913
        %v992 = vadd.f32 %v726, %v916
        %v993 = vadd.f32 %v728, %v918
        %v994 = vadd.f32 %v731, %v921
        %v995 = vadd.f32 %v733, %v923
        %v996 = vadd.f32 %v736, %v926
        %v997 = vadd.f32 %v738, %v928
        %v998 = vadd.f32 %v741, %v931
        %v999 = vadd.f32 %v743, %v933
        %v1000 = vadd.f32 %v746, %v936
        %v1001 = vadd.f32 %v748, %v938
        %v1002 = vadd.f32 %v751, %v941
        %v1003 = vadd.f32 %v753, %v943
        %v1004 = vadd.f32 %v756, %v946
        %v1005 = vadd.f32 %v758, %v948
        %v1006 = vadd.f32 %v761, %v951
        %v1007 = vadd.f32 %v763, %v953
        %v1008 = vadd.f32 %v766, %v956
        %v1009 = vadd.f32 %v768, %v958
        %v1010 = vadd.f32 %v771, %v961
        %v1011 = vadd.f32 %v773, %v963
        %v1012 = vadd.f32 %v776, %v966
        %v1013 = vadd.f32 %v778, %v968
        %v1014 = vadd.f32 %v781, %v971
        %v1015 = vadd.f32 %v783, %v973
        %v1016 = vadd.f32 %v786, %v976
        %v1017 = vadd.f32 %v788, %v978
        %v1018 = vadd.f32 %v791, %v981
        %v1019 = vadd.f32 %v793, %v983
        %v1020 = vadd.f32 %v796, %v986
        %v1021 = vadd.f32 %v798, %v988
        %v1022 = vld [vmem:[%s387] sm:$0xff]
        %v1023 = vld [vmem:[%s387 + $0x8] sm:$0xff]
        %v1024 = vld [vmem:[%s387 + $0x18] sm:$0xff]
        %v1025 = vld [vmem:[%s387 + $0x20] sm:$0xff]
        %v1026 = vld [vmem:[%s387 + $0x30] sm:$0xff]
        %v1027 = vld [vmem:[%s387 + $0x38] sm:$0xff]
        %v1028 = vld [vmem:[%s387 + $0x48] sm:$0xff]
        %v1029 = vld [vmem:[%s387 + $0x50] sm:$0xff]
        %v1030 = vld [vmem:[%s387 + $0x60] sm:$0xff]
        %v1031 = vld [vmem:[%s387 + $0x68] sm:$0xff]
        %v1032 = vld [vmem:[%s387 + $0x78] sm:$0xff]
        %v1033 = vld [vmem:[%s387 + $0x80] sm:$0xff]
        %v1034 = vld [vmem:[%s387 + $0x90] sm:$0xff]
        %v1035 = vld [vmem:[%s387 + $0x98] sm:$0xff]
        %v1036 = vld [vmem:[%s387 + $0xa8] sm:$0xff]
        %v1037 = vld [vmem:[%s387 + $0xb0] sm:$0xff]
        %v1038 = vld [vmem:[%s387 + $0xc0] sm:$0xff]
        %v1039 = vld [vmem:[%s387 + $0xc8] sm:$0xff]
        %v1040 = vld [vmem:[%s387 + $0xd8] sm:$0xff]
        %v1041 = vld [vmem:[%s387 + $0xe0] sm:$0xff]
        %v1042 = vld [vmem:[%s387 + $0xf0] sm:$0xff]
        %v1043 = vld [vmem:[%s387 + $0xf8] sm:$0xff]
        %v1044 = vld [vmem:[%s387 + $0x108] sm:$0xff]
        %v1045 = vld [vmem:[%s387 + $0x110] sm:$0xff]
        %v1046 = vld [vmem:[%s387 + $0x120] sm:$0xff]
        %v1047 = vld [vmem:[%s387 + $0x128] sm:$0xff]
        %v1048 = vld [vmem:[%s387 + $0x138] sm:$0xff]
        %v1049 = vld [vmem:[%s387 + $0x140] sm:$0xff]
        %v1050 = vld [vmem:[%s387 + $0x150] sm:$0xff]
        %v1051 = vld [vmem:[%s387 + $0x158] sm:$0xff]
        %v1052 = vld [vmem:[%s387 + $0x168] sm:$0xff]
        %v1053 = vld [vmem:[%s387 + $0x170] sm:$0xff]
        %v1054 = vpack.c.bf16 %v1023, %v1022
        %v1055 = vpack.c.bf16 %v1025, %v1024
        %v1056 = vpack.c.bf16 %v1027, %v1026
        %v1057 = vpack.c.bf16 %v1029, %v1028
        %v1058 = vpack.c.bf16 %v1031, %v1030
        %v1059 = vpack.c.bf16 %v1033, %v1032
        %v1060 = vpack.c.bf16 %v1035, %v1034
        %v1061 = vpack.c.bf16 %v1037, %v1036
        %v1062 = vpack.c.bf16 %v1039, %v1038
        %v1063 = vpack.c.bf16 %v1041, %v1040
        %v1064 = vpack.c.bf16 %v1043, %v1042
        %v1065 = vpack.c.bf16 %v1045, %v1044
        %v1066 = vpack.c.bf16 %v1047, %v1046
        %v1067 = vpack.c.bf16 %v1049, %v1048
        %v1068 = vpack.c.bf16 %v1051, %v1050
        %v1069 = vpack.c.bf16 %v1053, %v1052
        %s1070 = scalar_lea.vmem %s3, 6
        %v1071 = vld [vmem:[%s1070] sm:$0x3]
        %v1073 = vsel %vm331, %v1054, 0
        %v1076 = vsel %vm331, %v1055, 0
        %v1079 = vsel %vm331, %v1056, 0
        %v1082 = vsel %vm331, %v1057, 0
        %v1085 = vsel %vm331, %v1058, 0
        %v1088 = vsel %vm331, %v1059, 0
        %v1091 = vsel %vm331, %v1060, 0
        %v1094 = vsel %vm331, %v1061, 0
        %v1097 = vsel %vm331, %v1062, 0
        %v1100 = vsel %vm331, %v1063, 0
        %v1103 = vsel %vm331, %v1064, 0
        %v1106 = vsel %vm331, %v1065, 0
        %v1109 = vsel %vm331, %v1066, 0
        %v1112 = vsel %vm331, %v1067, 0
        %v1115 = vsel %vm331, %v1068, 0
        %v1118 = vsel %vm331, %v1069, 0
        %v1121 = vsel %vm567, %v1071, 0
        %1123 = vmatpush.bf16.msra.mxu0 0
        %1124 = vmatpush.bf16.msra.mxu0 0
        %1125 = vmatpush.bf16.msra.mxu0 0
        %1126 = vmatpush.bf16.msra.mxu0 0
        %1127 = vmatpush.bf16.msra.mxu0 0
        %1128 = vmatpush.bf16.msra.mxu0 0
        %1129 = vmatpush.bf16.msra.mxu0 0
        %1130 = vmatpush.bf16.msra.mxu0 %v1121
        %1131 = vmatmul.bf16.gmra.mxu0 %v1073
        %v1132 = vpop.f32.mrf.mxu0
        %v1133 = vadd.f32 0.0, %v1132
        %v1134 = vpop.f32.mrf.mxu0
        %v1135 = vadd.f32 0.0, %v1134
        %1136 = vmatmul.bf16.gmra.mxu0 %v1076
        %v1137 = vpop.f32.mrf.mxu0
        %v1138 = vadd.f32 0.0, %v1137
        %v1139 = vpop.f32.mrf.mxu0
        %v1140 = vadd.f32 0.0, %v1139
        %1141 = vmatmul.bf16.gmra.mxu0 %v1079
        %v1142 = vpop.f32.mrf.mxu0
        %v1143 = vadd.f32 0.0, %v1142
        %v1144 = vpop.f32.mrf.mxu0
        %v1145 = vadd.f32 0.0, %v1144
        %1146 = vmatmul.bf16.gmra.mxu0 %v1082
        %v1147 = vpop.f32.mrf.mxu0
        %v1148 = vadd.f32 0.0, %v1147
        %v1149 = vpop.f32.mrf.mxu0
        %v1150 = vadd.f32 0.0, %v1149
        %1151 = vmatmul.bf16.gmra.mxu0 %v1085
        %v1152 = vpop.f32.mrf.mxu0
        %v1153 = vadd.f32 0.0, %v1152
        %v1154 = vpop.f32.mrf.mxu0
        %v1155 = vadd.f32 0.0, %v1154
        %1156 = vmatmul.bf16.gmra.mxu0 %v1088
        %v1157 = vpop.f32.mrf.mxu0
        %v1158 = vadd.f32 0.0, %v1157
        %v1159 = vpop.f32.mrf.mxu0
        %v1160 = vadd.f32 0.0, %v1159
        %1161 = vmatmul.bf16.gmra.mxu0 %v1091
        %v1162 = vpop.f32.mrf.mxu0
        %v1163 = vadd.f32 0.0, %v1162
        %v1164 = vpop.f32.mrf.mxu0
        %v1165 = vadd.f32 0.0, %v1164
        %1166 = vmatmul.bf16.gmra.mxu0 %v1094
        %v1167 = vpop.f32.mrf.mxu0
        %v1168 = vadd.f32 0.0, %v1167
        %v1169 = vpop.f32.mrf.mxu0
        %v1170 = vadd.f32 0.0, %v1169
        %1171 = vmatmul.bf16.gmra.mxu0 %v1097
        %v1172 = vpop.f32.mrf.mxu0
        %v1173 = vadd.f32 0.0, %v1172
        %v1174 = vpop.f32.mrf.mxu0
        %v1175 = vadd.f32 0.0, %v1174
        %1176 = vmatmul.bf16.gmra.mxu0 %v1100
        %v1177 = vpop.f32.mrf.mxu0
        %v1178 = vadd.f32 0.0, %v1177
        %v1179 = vpop.f32.mrf.mxu0
        %v1180 = vadd.f32 0.0, %v1179
        %1181 = vmatmul.bf16.gmra.mxu0 %v1103
        %v1182 = vpop.f32.mrf.mxu0
        %v1183 = vadd.f32 0.0, %v1182
        %v1184 = vpop.f32.mrf.mxu0
        %v1185 = vadd.f32 0.0, %v1184
        %1186 = vmatmul.bf16.gmra.mxu0 %v1106
        %v1187 = vpop.f32.mrf.mxu0
        %v1188 = vadd.f32 0.0, %v1187
        %v1189 = vpop.f32.mrf.mxu0
        %v1190 = vadd.f32 0.0, %v1189
        %1191 = vmatmul.bf16.gmra.mxu0 %v1109
        %v1192 = vpop.f32.mrf.mxu0
        %v1193 = vadd.f32 0.0, %v1192
        %v1194 = vpop.f32.mrf.mxu0
        %v1195 = vadd.f32 0.0, %v1194
        %1196 = vmatmul.bf16.gmra.mxu0 %v1112
        %v1197 = vpop.f32.mrf.mxu0
        %v1198 = vadd.f32 0.0, %v1197
        %v1199 = vpop.f32.mrf.mxu0
        %v1200 = vadd.f32 0.0, %v1199
        %1201 = vmatmul.bf16.gmra.mxu0 %v1115
        %v1202 = vpop.f32.mrf.mxu0
        %v1203 = vadd.f32 0.0, %v1202
        %v1204 = vpop.f32.mrf.mxu0
        %v1205 = vadd.f32 0.0, %v1204
        %1206 = vmatmul.bf16.gmra.mxu0 %v1118
        %v1207 = vpop.f32.mrf.mxu0
        %v1208 = vadd.f32 0.0, %v1207
        %v1209 = vpop.f32.mrf.mxu0
        %v1210 = vadd.f32 0.0, %v1209
        %1211 = vdwg.mxu0
        %v1212 = vadd.f32 %v990, %v1133
        %v1213 = vadd.f32 %v991, %v1135
        %v1214 = vadd.f32 %v992, %v1138
        %v1215 = vadd.f32 %v993, %v1140
        %v1216 = vadd.f32 %v994, %v1143
        %v1217 = vadd.f32 %v995, %v1145
        %v1218 = vadd.f32 %v996, %v1148
        %v1219 = vadd.f32 %v997, %v1150
        %v1220 = vadd.f32 %v998, %v1153
        %v1221 = vadd.f32 %v999, %v1155
        %v1222 = vadd.f32 %v1000, %v1158
        %v1223 = vadd.f32 %v1001, %v1160
        %v1224 = vadd.f32 %v1002, %v1163
        %v1225 = vadd.f32 %v1003, %v1165
        %v1226 = vadd.f32 %v1004, %v1168
        %v1227 = vadd.f32 %v1005, %v1170
        %v1228 = vadd.f32 %v1006, %v1173
        %v1229 = vadd.f32 %v1007, %v1175
        %v1230 = vadd.f32 %v1008, %v1178
        %v1231 = vadd.f32 %v1009, %v1180
        %v1232 = vadd.f32 %v1010, %v1183
        %v1233 = vadd.f32 %v1011, %v1185
        %v1234 = vadd.f32 %v1012, %v1188
        %v1235 = vadd.f32 %v1013, %v1190
        %v1236 = vadd.f32 %v1014, %v1193
        %v1237 = vadd.f32 %v1015, %v1195
        %v1238 = vadd.f32 %v1016, %v1198
        %v1239 = vadd.f32 %v1017, %v1200
        %v1240 = vadd.f32 %v1018, %v1203
        %v1241 = vadd.f32 %v1019, %v1205
        %v1242 = vadd.f32 %v1020, %v1208
        %v1243 = vadd.f32 %v1021, %v1210
        %v1244 = vld [vmem:[%s387 + $0x1] sm:$0xff]
        %v1245 = vld [vmem:[%s387 + $0x9] sm:$0xff]
        %v1246 = vld [vmem:[%s387 + $0x19] sm:$0xff]
        %v1247 = vld [vmem:[%s387 + $0x21] sm:$0xff]
        %v1248 = vld [vmem:[%s387 + $0x31] sm:$0xff]
        %v1249 = vld [vmem:[%s387 + $0x39] sm:$0xff]
        %v1250 = vld [vmem:[%s387 + $0x49] sm:$0xff]
        %v1251 = vld [vmem:[%s387 + $0x51] sm:$0xff]
        %v1252 = vld [vmem:[%s387 + $0x61] sm:$0xff]
        %v1253 = vld [vmem:[%s387 + $0x69] sm:$0xff]
        %v1254 = vld [vmem:[%s387 + $0x79] sm:$0xff]
        %v1255 = vld [vmem:[%s387 + $0x81] sm:$0xff]
        %v1256 = vld [vmem:[%s387 + $0x91] sm:$0xff]
        %v1257 = vld [vmem:[%s387 + $0x99] sm:$0xff]
        %v1258 = vld [vmem:[%s387 + $0xa9] sm:$0xff]
        %v1259 = vld [vmem:[%s387 + $0xb1] sm:$0xff]
        %v1260 = vld [vmem:[%s387 + $0xc1] sm:$0xff]
        %v1261 = vld [vmem:[%s387 + $0xc9] sm:$0xff]
        %v1262 = vld [vmem:[%s387 + $0xd9] sm:$0xff]
        %v1263 = vld [vmem:[%s387 + $0xe1] sm:$0xff]
        %v1264 = vld [vmem:[%s387 + $0xf1] sm:$0xff]
        %v1265 = vld [vmem:[%s387 + $0xf9] sm:$0xff]
        %v1266 = vld [vmem:[%s387 + $0x109] sm:$0xff]
        %v1267 = vld [vmem:[%s387 + $0x111] sm:$0xff]
        %v1268 = vld [vmem:[%s387 + $0x121] sm:$0xff]
        %v1269 = vld [vmem:[%s387 + $0x129] sm:$0xff]
        %v1270 = vld [vmem:[%s387 + $0x139] sm:$0xff]
        %v1271 = vld [vmem:[%s387 + $0x141] sm:$0xff]
        %v1272 = vld [vmem:[%s387 + $0x151] sm:$0xff]
        %v1273 = vld [vmem:[%s387 + $0x159] sm:$0xff]
        %v1274 = vld [vmem:[%s387 + $0x169] sm:$0xff]
        %v1275 = vld [vmem:[%s387 + $0x171] sm:$0xff]
        %v1276 = vpack.c.bf16 %v1245, %v1244
        %v1277 = vpack.c.bf16 %v1247, %v1246
        %v1278 = vpack.c.bf16 %v1249, %v1248
        %v1279 = vpack.c.bf16 %v1251, %v1250
        %v1280 = vpack.c.bf16 %v1253, %v1252
        %v1281 = vpack.c.bf16 %v1255, %v1254
        %v1282 = vpack.c.bf16 %v1257, %v1256
        %v1283 = vpack.c.bf16 %v1259, %v1258
        %v1284 = vpack.c.bf16 %v1261, %v1260
        %v1285 = vpack.c.bf16 %v1263, %v1262
        %v1286 = vpack.c.bf16 %v1265, %v1264
        %v1287 = vpack.c.bf16 %v1267, %v1266
        %v1288 = vpack.c.bf16 %v1269, %v1268
        %v1289 = vpack.c.bf16 %v1271, %v1270
        %v1290 = vpack.c.bf16 %v1273, %v1272
        %v1291 = vpack.c.bf16 %v1275, %v1274
        %s1292 = scalar_lea.vmem %s3, 8
        %v1293 = vld [vmem:[%s1292] sm:$0x3]
        %v1295 = vsel %vm331, %v1276, 0
        %v1298 = vsel %vm331, %v1277, 0
        %v1301 = vsel %vm331, %v1278, 0
        %v1304 = vsel %vm331, %v1279, 0
        %v1307 = vsel %vm331, %v1280, 0
        %v1310 = vsel %vm331, %v1281, 0
        %v1313 = vsel %vm331, %v1282, 0
        %v1316 = vsel %vm331, %v1283, 0
        %v1319 = vsel %vm331, %v1284, 0
        %v1322 = vsel %vm331, %v1285, 0
        %v1325 = vsel %vm331, %v1286, 0
        %v1328 = vsel %vm331, %v1287, 0
        %v1331 = vsel %vm331, %v1288, 0
        %v1334 = vsel %vm331, %v1289, 0
        %v1337 = vsel %vm331, %v1290, 0
        %v1340 = vsel %vm331, %v1291, 0
        %v1343 = vsel %vm567, %v1293, 0
        %1345 = vmatpush.bf16.msra.mxu0 0
        %1346 = vmatpush.bf16.msra.mxu0 0
        %1347 = vmatpush.bf16.msra.mxu0 0
        %1348 = vmatpush.bf16.msra.mxu0 0
        %1349 = vmatpush.bf16.msra.mxu0 0
        %1350 = vmatpush.bf16.msra.mxu0 0
        %1351 = vmatpush.bf16.msra.mxu0 0
        %1352 = vmatpush.bf16.msra.mxu0 %v1343
        %1353 = vmatmul.bf16.gmra.mxu0 %v1295
        %v1354 = vpop.f32.mrf.mxu0
        %v1355 = vadd.f32 0.0, %v1354
        %v1356 = vpop.f32.mrf.mxu0
        %v1357 = vadd.f32 0.0, %v1356
        %1358 = vmatmul.bf16.gmra.mxu0 %v1298
        %v1359 = vpop.f32.mrf.mxu0
        %v1360 = vadd.f32 0.0, %v1359
        %v1361 = vpop.f32.mrf.mxu0
        %v1362 = vadd.f32 0.0, %v1361
        %1363 = vmatmul.bf16.gmra.mxu0 %v1301
        %v1364 = vpop.f32.mrf.mxu0
        %v1365 = vadd.f32 0.0, %v1364
        %v1366 = vpop.f32.mrf.mxu0
        %v1367 = vadd.f32 0.0, %v1366
        %1368 = vmatmul.bf16.gmra.mxu0 %v1304
        %v1369 = vpop.f32.mrf.mxu0
        %v1370 = vadd.f32 0.0, %v1369
        %v1371 = vpop.f32.mrf.mxu0
        %v1372 = vadd.f32 0.0, %v1371
        %1373 = vmatmul.bf16.gmra.mxu0 %v1307
        %v1374 = vpop.f32.mrf.mxu0
        %v1375 = vadd.f32 0.0, %v1374
        %v1376 = vpop.f32.mrf.mxu0
        %v1377 = vadd.f32 0.0, %v1376
        %1378 = vmatmul.bf16.gmra.mxu0 %v1310
        %v1379 = vpop.f32.mrf.mxu0
        %v1380 = vadd.f32 0.0, %v1379
        %v1381 = vpop.f32.mrf.mxu0
        %v1382 = vadd.f32 0.0, %v1381
        %1383 = vmatmul.bf16.gmra.mxu0 %v1313
        %v1384 = vpop.f32.mrf.mxu0
        %v1385 = vadd.f32 0.0, %v1384
        %v1386 = vpop.f32.mrf.mxu0
        %v1387 = vadd.f32 0.0, %v1386
        %1388 = vmatmul.bf16.gmra.mxu0 %v1316
        %v1389 = vpop.f32.mrf.mxu0
        %v1390 = vadd.f32 0.0, %v1389
        %v1391 = vpop.f32.mrf.mxu0
        %v1392 = vadd.f32 0.0, %v1391
        %1393 = vmatmul.bf16.gmra.mxu0 %v1319
        %v1394 = vpop.f32.mrf.mxu0
        %v1395 = vadd.f32 0.0, %v1394
        %v1396 = vpop.f32.mrf.mxu0
        %v1397 = vadd.f32 0.0, %v1396
        %1398 = vmatmul.bf16.gmra.mxu0 %v1322
        %v1399 = vpop.f32.mrf.mxu0
        %v1400 = vadd.f32 0.0, %v1399
        %v1401 = vpop.f32.mrf.mxu0
        %v1402 = vadd.f32 0.0, %v1401
        %1403 = vmatmul.bf16.gmra.mxu0 %v1325
        %v1404 = vpop.f32.mrf.mxu0
        %v1405 = vadd.f32 0.0, %v1404
        %v1406 = vpop.f32.mrf.mxu0
        %v1407 = vadd.f32 0.0, %v1406
        %1408 = vmatmul.bf16.gmra.mxu0 %v1328
        %v1409 = vpop.f32.mrf.mxu0
        %v1410 = vadd.f32 0.0, %v1409
        %v1411 = vpop.f32.mrf.mxu0
        %v1412 = vadd.f32 0.0, %v1411
        %1413 = vmatmul.bf16.gmra.mxu0 %v1331
        %v1414 = vpop.f32.mrf.mxu0
        %v1415 = vadd.f32 0.0, %v1414
        %v1416 = vpop.f32.mrf.mxu0
        %v1417 = vadd.f32 0.0, %v1416
        %1418 = vmatmul.bf16.gmra.mxu0 %v1334
        %v1419 = vpop.f32.mrf.mxu0
        %v1420 = vadd.f32 0.0, %v1419
        %v1421 = vpop.f32.mrf.mxu0
        %v1422 = vadd.f32 0.0, %v1421
        %1423 = vmatmul.bf16.gmra.mxu0 %v1337
        %v1424 = vpop.f32.mrf.mxu0
        %v1425 = vadd.f32 0.0, %v1424
        %v1426 = vpop.f32.mrf.mxu0
        %v1427 = vadd.f32 0.0, %v1426
        %1428 = vmatmul.bf16.gmra.mxu0 %v1340
        %v1429 = vpop.f32.mrf.mxu0
        %v1430 = vadd.f32 0.0, %v1429
        %v1431 = vpop.f32.mrf.mxu0
        %v1432 = vadd.f32 0.0, %v1431
        %1433 = vdwg.mxu0
        %v1434 = vadd.f32 %v1212, %v1355
        %v1435 = vadd.f32 %v1213, %v1357
        %v1436 = vadd.f32 %v1214, %v1360
        %v1437 = vadd.f32 %v1215, %v1362
        %v1438 = vadd.f32 %v1216, %v1365
        %v1439 = vadd.f32 %v1217, %v1367
        %v1440 = vadd.f32 %v1218, %v1370
        %v1441 = vadd.f32 %v1219, %v1372
        %v1442 = vadd.f32 %v1220, %v1375
        %v1443 = vadd.f32 %v1221, %v1377
        %v1444 = vadd.f32 %v1222, %v1380
        %v1445 = vadd.f32 %v1223, %v1382
        %v1446 = vadd.f32 %v1224, %v1385
        %v1447 = vadd.f32 %v1225, %v1387
        %v1448 = vadd.f32 %v1226, %v1390
        %v1449 = vadd.f32 %v1227, %v1392
        %v1450 = vadd.f32 %v1228, %v1395
        %v1451 = vadd.f32 %v1229, %v1397
        %v1452 = vadd.f32 %v1230, %v1400
        %v1453 = vadd.f32 %v1231, %v1402
        %v1454 = vadd.f32 %v1232, %v1405
        %v1455 = vadd.f32 %v1233, %v1407
        %v1456 = vadd.f32 %v1234, %v1410
        %v1457 = vadd.f32 %v1235, %v1412
        %v1458 = vadd.f32 %v1236, %v1415
        %v1459 = vadd.f32 %v1237, %v1417
        %v1460 = vadd.f32 %v1238, %v1420
        %v1461 = vadd.f32 %v1239, %v1422
        %v1462 = vadd.f32 %v1240, %v1425
        %v1463 = vadd.f32 %v1241, %v1427
        %v1464 = vadd.f32 %v1242, %v1430
        %v1465 = vadd.f32 %v1243, %v1432
        %v1466 = vld [vmem:[%s387 + $0x2] sm:$0xff]
        %v1467 = vld [vmem:[%s387 + $0xa] sm:$0xff]
        %v1468 = vld [vmem:[%s387 + $0x1a] sm:$0xff]
        %v1469 = vld [vmem:[%s387 + $0x22] sm:$0xff]
        %v1470 = vld [vmem:[%s387 + $0x32] sm:$0xff]
        %v1471 = vld [vmem:[%s387 + $0x3a] sm:$0xff]
        %v1472 = vld [vmem:[%s387 + $0x4a] sm:$0xff]
        %v1473 = vld [vmem:[%s387 + $0x52] sm:$0xff]
        %v1474 = vld [vmem:[%s387 + $0x62] sm:$0xff]
        %v1475 = vld [vmem:[%s387 + $0x6a] sm:$0xff]
        %v1476 = vld [vmem:[%s387 + $0x7a] sm:$0xff]
        %v1477 = vld [vmem:[%s387 + $0x82] sm:$0xff]
        %v1478 = vld [vmem:[%s387 + $0x92] sm:$0xff]
        %v1479 = vld [vmem:[%s387 + $0x9a] sm:$0xff]
        %v1480 = vld [vmem:[%s387 + $0xaa] sm:$0xff]
        %v1481 = vld [vmem:[%s387 + $0xb2] sm:$0xff]
        %v1482 = vld [vmem:[%s387 + $0xc2] sm:$0xff]
        %v1483 = vld [vmem:[%s387 + $0xca] sm:$0xff]
        %v1484 = vld [vmem:[%s387 + $0xda] sm:$0xff]
        %v1485 = vld [vmem:[%s387 + $0xe2] sm:$0xff]
        %v1486 = vld [vmem:[%s387 + $0xf2] sm:$0xff]
        %v1487 = vld [vmem:[%s387 + $0xfa] sm:$0xff]
        %v1488 = vld [vmem:[%s387 + $0x10a] sm:$0xff]
        %v1489 = vld [vmem:[%s387 + $0x112] sm:$0xff]
        %v1490 = vld [vmem:[%s387 + $0x122] sm:$0xff]
        %v1491 = vld [vmem:[%s387 + $0x12a] sm:$0xff]
        %v1492 = vld [vmem:[%s387 + $0x13a] sm:$0xff]
        %v1493 = vld [vmem:[%s387 + $0x142] sm:$0xff]
        %v1494 = vld [vmem:[%s387 + $0x152] sm:$0xff]
        %v1495 = vld [vmem:[%s387 + $0x15a] sm:$0xff]
        %v1496 = vld [vmem:[%s387 + $0x16a] sm:$0xff]
        %v1497 = vld [vmem:[%s387 + $0x172] sm:$0xff]
        %v1498 = vpack.c.bf16 %v1467, %v1466
        %v1499 = vpack.c.bf16 %v1469, %v1468
        %v1500 = vpack.c.bf16 %v1471, %v1470
        %v1501 = vpack.c.bf16 %v1473, %v1472
        %v1502 = vpack.c.bf16 %v1475, %v1474
        %v1503 = vpack.c.bf16 %v1477, %v1476
        %v1504 = vpack.c.bf16 %v1479, %v1478
        %v1505 = vpack.c.bf16 %v1481, %v1480
        %v1506 = vpack.c.bf16 %v1483, %v1482
        %v1507 = vpack.c.bf16 %v1485, %v1484
        %v1508 = vpack.c.bf16 %v1487, %v1486
        %v1509 = vpack.c.bf16 %v1489, %v1488
        %v1510 = vpack.c.bf16 %v1491, %v1490
        %v1511 = vpack.c.bf16 %v1493, %v1492
        %v1512 = vpack.c.bf16 %v1495, %v1494
        %v1513 = vpack.c.bf16 %v1497, %v1496
        %s1514 = scalar_lea.vmem %s3, 10
        %v1515 = vld [vmem:[%s1514] sm:$0x3]
        %v1517 = vsel %vm331, %v1498, 0
        %v1520 = vsel %vm331, %v1499, 0
        %v1523 = vsel %vm331, %v1500, 0
        %v1526 = vsel %vm331, %v1501, 0
        %v1529 = vsel %vm331, %v1502, 0
        %v1532 = vsel %vm331, %v1503, 0
        %v1535 = vsel %vm331, %v1504, 0
        %v1538 = vsel %vm331, %v1505, 0
        %v1541 = vsel %vm331, %v1506, 0
        %v1544 = vsel %vm331, %v1507, 0
        %v1547 = vsel %vm331, %v1508, 0
        %v1550 = vsel %vm331, %v1509, 0
        %v1553 = vsel %vm331, %v1510, 0
        %v1556 = vsel %vm331, %v1511, 0
        %v1559 = vsel %vm331, %v1512, 0
        %v1562 = vsel %vm331, %v1513, 0
        %v1565 = vsel %vm567, %v1515, 0
        %1567 = vmatpush.bf16.msra.mxu0 0
        %1568 = vmatpush.bf16.msra.mxu0 0
        %1569 = vmatpush.bf16.msra.mxu0 0
        %1570 = vmatpush.bf16.msra.mxu0 0
        %1571 = vmatpush.bf16.msra.mxu0 0
        %1572 = vmatpush.bf16.msra.mxu0 0
        %1573 = vmatpush.bf16.msra.mxu0 0
        %1574 = vmatpush.bf16.msra.mxu0 %v1565
        %1575 = vmatmul.bf16.gmra.mxu0 %v1517
        %v1576 = vpop.f32.mrf.mxu0
        %v1577 = vadd.f32 0.0, %v1576
        %v1578 = vpop.f32.mrf.mxu0
        %v1579 = vadd.f32 0.0, %v1578
        %1580 = vmatmul.bf16.gmra.mxu0 %v1520
        %v1581 = vpop.f32.mrf.mxu0
        %v1582 = vadd.f32 0.0, %v1581
        %v1583 = vpop.f32.mrf.mxu0
        %v1584 = vadd.f32 0.0, %v1583
        %1585 = vmatmul.bf16.gmra.mxu0 %v1523
        %v1586 = vpop.f32.mrf.mxu0
        %v1587 = vadd.f32 0.0, %v1586
        %v1588 = vpop.f32.mrf.mxu0
        %v1589 = vadd.f32 0.0, %v1588
        %1590 = vmatmul.bf16.gmra.mxu0 %v1526
        %v1591 = vpop.f32.mrf.mxu0
        %v1592 = vadd.f32 0.0, %v1591
        %v1593 = vpop.f32.mrf.mxu0
        %v1594 = vadd.f32 0.0, %v1593
        %1595 = vmatmul.bf16.gmra.mxu0 %v1529
        %v1596 = vpop.f32.mrf.mxu0
        %v1597 = vadd.f32 0.0, %v1596
        %v1598 = vpop.f32.mrf.mxu0
        %v1599 = vadd.f32 0.0, %v1598
        %1600 = vmatmul.bf16.gmra.mxu0 %v1532
        %v1601 = vpop.f32.mrf.mxu0
        %v1602 = vadd.f32 0.0, %v1601
        %v1603 = vpop.f32.mrf.mxu0
        %v1604 = vadd.f32 0.0, %v1603
        %1605 = vmatmul.bf16.gmra.mxu0 %v1535
        %v1606 = vpop.f32.mrf.mxu0
        %v1607 = vadd.f32 0.0, %v1606
        %v1608 = vpop.f32.mrf.mxu0
        %v1609 = vadd.f32 0.0, %v1608
        %1610 = vmatmul.bf16.gmra.mxu0 %v1538
        %v1611 = vpop.f32.mrf.mxu0
        %v1612 = vadd.f32 0.0, %v1611
        %v1613 = vpop.f32.mrf.mxu0
        %v1614 = vadd.f32 0.0, %v1613
        %1615 = vmatmul.bf16.gmra.mxu0 %v1541
        %v1616 = vpop.f32.mrf.mxu0
        %v1617 = vadd.f32 0.0, %v1616
        %v1618 = vpop.f32.mrf.mxu0
        %v1619 = vadd.f32 0.0, %v1618
        %1620 = vmatmul.bf16.gmra.mxu0 %v1544
        %v1621 = vpop.f32.mrf.mxu0
        %v1622 = vadd.f32 0.0, %v1621
        %v1623 = vpop.f32.mrf.mxu0
        %v1624 = vadd.f32 0.0, %v1623
        %1625 = vmatmul.bf16.gmra.mxu0 %v1547
        %v1626 = vpop.f32.mrf.mxu0
        %v1627 = vadd.f32 0.0, %v1626
        %v1628 = vpop.f32.mrf.mxu0
        %v1629 = vadd.f32 0.0, %v1628
        %1630 = vmatmul.bf16.gmra.mxu0 %v1550
        %v1631 = vpop.f32.mrf.mxu0
        %v1632 = vadd.f32 0.0, %v1631
        %v1633 = vpop.f32.mrf.mxu0
        %v1634 = vadd.f32 0.0, %v1633
        %1635 = vmatmul.bf16.gmra.mxu0 %v1553
        %v1636 = vpop.f32.mrf.mxu0
        %v1637 = vadd.f32 0.0, %v1636
        %v1638 = vpop.f32.mrf.mxu0
        %v1639 = vadd.f32 0.0, %v1638
        %1640 = vmatmul.bf16.gmra.mxu0 %v1556
        %v1641 = vpop.f32.mrf.mxu0
        %v1642 = vadd.f32 0.0, %v1641
        %v1643 = vpop.f32.mrf.mxu0
        %v1644 = vadd.f32 0.0, %v1643
        %1645 = vmatmul.bf16.gmra.mxu0 %v1559
        %v1646 = vpop.f32.mrf.mxu0
        %v1647 = vadd.f32 0.0, %v1646
        %v1648 = vpop.f32.mrf.mxu0
        %v1649 = vadd.f32 0.0, %v1648
        %1650 = vmatmul.bf16.gmra.mxu0 %v1562
        %v1651 = vpop.f32.mrf.mxu0
        %v1652 = vadd.f32 0.0, %v1651
        %v1653 = vpop.f32.mrf.mxu0
        %v1654 = vadd.f32 0.0, %v1653
        %1655 = vdwg.mxu0
        %v1656 = vadd.f32 %v1434, %v1577
        %v1657 = vadd.f32 %v1435, %v1579
        %v1658 = vadd.f32 %v1436, %v1582
        %v1659 = vadd.f32 %v1437, %v1584
        %v1660 = vadd.f32 %v1438, %v1587
        %v1661 = vadd.f32 %v1439, %v1589
        %v1662 = vadd.f32 %v1440, %v1592
        %v1663 = vadd.f32 %v1441, %v1594
        %v1664 = vadd.f32 %v1442, %v1597
        %v1665 = vadd.f32 %v1443, %v1599
        %v1666 = vadd.f32 %v1444, %v1602
        %v1667 = vadd.f32 %v1445, %v1604
        %v1668 = vadd.f32 %v1446, %v1607
        %v1669 = vadd.f32 %v1447, %v1609
        %v1670 = vadd.f32 %v1448, %v1612
        %v1671 = vadd.f32 %v1449, %v1614
        %v1672 = vadd.f32 %v1450, %v1617
        %v1673 = vadd.f32 %v1451, %v1619
        %v1674 = vadd.f32 %v1452, %v1622
        %v1675 = vadd.f32 %v1453, %v1624
        %v1676 = vadd.f32 %v1454, %v1627
        %v1677 = vadd.f32 %v1455, %v1629
        %v1678 = vadd.f32 %v1456, %v1632
        %v1679 = vadd.f32 %v1457, %v1634
        %v1680 = vadd.f32 %v1458, %v1637
        %v1681 = vadd.f32 %v1459, %v1639
        %v1682 = vadd.f32 %v1460, %v1642
        %v1683 = vadd.f32 %v1461, %v1644
        %v1684 = vadd.f32 %v1462, %v1647
        %v1685 = vadd.f32 %v1463, %v1649
        %v1686 = vadd.f32 %v1464, %v1652
        %v1687 = vadd.f32 %v1465, %v1654
        %s1688 = scalar_lea.vmem [#allocation2], 48
        %v1689 = vld [vmem:[%s1688] sm:$0xff]
        %v1690 = vld [vmem:[%s1688 + $0x8] sm:$0xff]
        %v1691 = vld [vmem:[%s1688 + $0x18] sm:$0xff]
        %v1692 = vld [vmem:[%s1688 + $0x20] sm:$0xff]
        %v1693 = vld [vmem:[%s1688 + $0x30] sm:$0xff]
        %v1694 = vld [vmem:[%s1688 + $0x38] sm:$0xff]
        %v1695 = vld [vmem:[%s1688 + $0x48] sm:$0xff]
        %v1696 = vld [vmem:[%s1688 + $0x50] sm:$0xff]
        %v1697 = vld [vmem:[%s1688 + $0x60] sm:$0xff]
        %v1698 = vld [vmem:[%s1688 + $0x68] sm:$0xff]
        %v1699 = vld [vmem:[%s1688 + $0x78] sm:$0xff]
        %v1700 = vld [vmem:[%s1688 + $0x80] sm:$0xff]
        %v1701 = vld [vmem:[%s1688 + $0x90] sm:$0xff]
        %v1702 = vld [vmem:[%s1688 + $0x98] sm:$0xff]
        %v1703 = vld [vmem:[%s1688 + $0xa8] sm:$0xff]
        %v1704 = vld [vmem:[%s1688 + $0xb0] sm:$0xff]
        %v1705 = vld [vmem:[%s1688 + $0xc0] sm:$0xff]
        %v1706 = vld [vmem:[%s1688 + $0xc8] sm:$0xff]
        %v1707 = vld [vmem:[%s1688 + $0xd8] sm:$0xff]
        %v1708 = vld [vmem:[%s1688 + $0xe0] sm:$0xff]
        %v1709 = vld [vmem:[%s1688 + $0xf0] sm:$0xff]
        %v1710 = vld [vmem:[%s1688 + $0xf8] sm:$0xff]
        %v1711 = vld [vmem:[%s1688 + $0x108] sm:$0xff]
        %v1712 = vld [vmem:[%s1688 + $0x110] sm:$0xff]
        %v1713 = vld [vmem:[%s1688 + $0x120] sm:$0xff]
        %v1714 = vld [vmem:[%s1688 + $0x128] sm:$0xff]
        %v1715 = vld [vmem:[%s1688 + $0x138] sm:$0xff]
        %v1716 = vld [vmem:[%s1688 + $0x140] sm:$0xff]
        %v1717 = vld [vmem:[%s1688 + $0x150] sm:$0xff]
        %v1718 = vld [vmem:[%s1688 + $0x158] sm:$0xff]
        %v1719 = vld [vmem:[%s1688 + $0x168] sm:$0xff]
        %v1720 = vld [vmem:[%s1688 + $0x170] sm:$0xff]
        %v1721 = vpack.c.bf16 %v1690, %v1689
        %v1722 = vpack.c.bf16 %v1692, %v1691
        %v1723 = vpack.c.bf16 %v1694, %v1693
        %v1724 = vpack.c.bf16 %v1696, %v1695
        %v1725 = vpack.c.bf16 %v1698, %v1697
        %v1726 = vpack.c.bf16 %v1700, %v1699
        %v1727 = vpack.c.bf16 %v1702, %v1701
        %v1728 = vpack.c.bf16 %v1704, %v1703
        %v1729 = vpack.c.bf16 %v1706, %v1705
        %v1730 = vpack.c.bf16 %v1708, %v1707
        %v1731 = vpack.c.bf16 %v1710, %v1709
        %v1732 = vpack.c.bf16 %v1712, %v1711
        %v1733 = vpack.c.bf16 %v1714, %v1713
        %v1734 = vpack.c.bf16 %v1716, %v1715
        %v1735 = vpack.c.bf16 %v1718, %v1717
        %v1736 = vpack.c.bf16 %v1720, %v1719
        %s1737 = scalar_lea.vmem %s3, 12
        %v1738 = vld [vmem:[%s1737] sm:$0x3]
        %v1740 = vsel %vm331, %v1721, 0
        %v1743 = vsel %vm331, %v1722, 0
        %v1746 = vsel %vm331, %v1723, 0
        %v1749 = vsel %vm331, %v1724, 0
        %v1752 = vsel %vm331, %v1725, 0
        %v1755 = vsel %vm331, %v1726, 0
        %v1758 = vsel %vm331, %v1727, 0
        %v1761 = vsel %vm331, %v1728, 0
        %v1764 = vsel %vm331, %v1729, 0
        %v1767 = vsel %vm331, %v1730, 0
        %v1770 = vsel %vm331, %v1731, 0
        %v1773 = vsel %vm331, %v1732, 0
        %v1776 = vsel %vm331, %v1733, 0
        %v1779 = vsel %vm331, %v1734, 0
        %v1782 = vsel %vm331, %v1735, 0
        %v1785 = vsel %vm331, %v1736, 0
        %v1788 = vsel %vm567, %v1738, 0
        %1790 = vmatpush.bf16.msra.mxu0 0
        %1791 = vmatpush.bf16.msra.mxu0 0
        %1792 = vmatpush.bf16.msra.mxu0 0
        %1793 = vmatpush.bf16.msra.mxu0 0
        %1794 = vmatpush.bf16.msra.mxu0 0
        %1795 = vmatpush.bf16.msra.mxu0 0
        %1796 = vmatpush.bf16.msra.mxu0 0
        %1797 = vmatpush.bf16.msra.mxu0 %v1788
        %1798 = vmatmul.bf16.gmra.mxu0 %v1740
        %v1799 = vpop.f32.mrf.mxu0
        %v1800 = vadd.f32 0.0, %v1799
        %v1801 = vpop.f32.mrf.mxu0
        %v1802 = vadd.f32 0.0, %v1801
        %1803 = vmatmul.bf16.gmra.mxu0 %v1743
        %v1804 = vpop.f32.mrf.mxu0
        %v1805 = vadd.f32 0.0, %v1804
        %v1806 = vpop.f32.mrf.mxu0
        %v1807 = vadd.f32 0.0, %v1806
        %1808 = vmatmul.bf16.gmra.mxu0 %v1746
        %v1809 = vpop.f32.mrf.mxu0
        %v1810 = vadd.f32 0.0, %v1809
        %v1811 = vpop.f32.mrf.mxu0
        %v1812 = vadd.f32 0.0, %v1811
        %1813 = vmatmul.bf16.gmra.mxu0 %v1749
        %v1814 = vpop.f32.mrf.mxu0
        %v1815 = vadd.f32 0.0, %v1814
        %v1816 = vpop.f32.mrf.mxu0
        %v1817 = vadd.f32 0.0, %v1816
        %1818 = vmatmul.bf16.gmra.mxu0 %v1752
        %v1819 = vpop.f32.mrf.mxu0
        %v1820 = vadd.f32 0.0, %v1819
        %v1821 = vpop.f32.mrf.mxu0
        %v1822 = vadd.f32 0.0, %v1821
        %1823 = vmatmul.bf16.gmra.mxu0 %v1755
        %v1824 = vpop.f32.mrf.mxu0
        %v1825 = vadd.f32 0.0, %v1824
        %v1826 = vpop.f32.mrf.mxu0
        %v1827 = vadd.f32 0.0, %v1826
        %1828 = vmatmul.bf16.gmra.mxu0 %v1758
        %v1829 = vpop.f32.mrf.mxu0
        %v1830 = vadd.f32 0.0, %v1829
        %v1831 = vpop.f32.mrf.mxu0
        %v1832 = vadd.f32 0.0, %v1831
        %1833 = vmatmul.bf16.gmra.mxu0 %v1761
        %v1834 = vpop.f32.mrf.mxu0
        %v1835 = vadd.f32 0.0, %v1834
        %v1836 = vpop.f32.mrf.mxu0
        %v1837 = vadd.f32 0.0, %v1836
        %1838 = vmatmul.bf16.gmra.mxu0 %v1764
        %v1839 = vpop.f32.mrf.mxu0
        %v1840 = vadd.f32 0.0, %v1839
        %v1841 = vpop.f32.mrf.mxu0
        %v1842 = vadd.f32 0.0, %v1841
        %1843 = vmatmul.bf16.gmra.mxu0 %v1767
        %v1844 = vpop.f32.mrf.mxu0
        %v1845 = vadd.f32 0.0, %v1844
        %v1846 = vpop.f32.mrf.mxu0
        %v1847 = vadd.f32 0.0, %v1846
        %1848 = vmatmul.bf16.gmra.mxu0 %v1770
        %v1849 = vpop.f32.mrf.mxu0
        %v1850 = vadd.f32 0.0, %v1849
        %v1851 = vpop.f32.mrf.mxu0
        %v1852 = vadd.f32 0.0, %v1851
        %1853 = vmatmul.bf16.gmra.mxu0 %v1773
        %v1854 = vpop.f32.mrf.mxu0
        %v1855 = vadd.f32 0.0, %v1854
        %v1856 = vpop.f32.mrf.mxu0
        %v1857 = vadd.f32 0.0, %v1856
        %1858 = vmatmul.bf16.gmra.mxu0 %v1776
        %v1859 = vpop.f32.mrf.mxu0
        %v1860 = vadd.f32 0.0, %v1859
        %v1861 = vpop.f32.mrf.mxu0
        %v1862 = vadd.f32 0.0, %v1861
        %1863 = vmatmul.bf16.gmra.mxu0 %v1779
        %v1864 = vpop.f32.mrf.mxu0
        %v1865 = vadd.f32 0.0, %v1864
        %v1866 = vpop.f32.mrf.mxu0
        %v1867 = vadd.f32 0.0, %v1866
        %1868 = vmatmul.bf16.gmra.mxu0 %v1782
        %v1869 = vpop.f32.mrf.mxu0
        %v1870 = vadd.f32 0.0, %v1869
        %v1871 = vpop.f32.mrf.mxu0
        %v1872 = vadd.f32 0.0, %v1871
        %1873 = vmatmul.bf16.gmra.mxu0 %v1785
        %v1874 = vpop.f32.mrf.mxu0
        %v1875 = vadd.f32 0.0, %v1874
        %v1876 = vpop.f32.mrf.mxu0
        %v1877 = vadd.f32 0.0, %v1876
        %1878 = vdwg.mxu0
        %v1879 = vadd.f32 %v1656, %v1800
        %v1880 = vadd.f32 %v1657, %v1802
        %v1881 = vadd.f32 %v1658, %v1805
        %v1882 = vadd.f32 %v1659, %v1807
        %v1883 = vadd.f32 %v1660, %v1810
        %v1884 = vadd.f32 %v1661, %v1812
        %v1885 = vadd.f32 %v1662, %v1815
        %v1886 = vadd.f32 %v1663, %v1817
        %v1887 = vadd.f32 %v1664, %v1820
        %v1888 = vadd.f32 %v1665, %v1822
        %v1889 = vadd.f32 %v1666, %v1825
        %v1890 = vadd.f32 %v1667, %v1827
        %v1891 = vadd.f32 %v1668, %v1830
        %v1892 = vadd.f32 %v1669, %v1832
        %v1893 = vadd.f32 %v1670, %v1835
        %v1894 = vadd.f32 %v1671, %v1837
        %v1895 = vadd.f32 %v1672, %v1840
        %v1896 = vadd.f32 %v1673, %v1842
        %v1897 = vadd.f32 %v1674, %v1845
        %v1898 = vadd.f32 %v1675, %v1847
        %v1899 = vadd.f32 %v1676, %v1850
        %v1900 = vadd.f32 %v1677, %v1852
        %v1901 = vadd.f32 %v1678, %v1855
        %v1902 = vadd.f32 %v1679, %v1857
        %v1903 = vadd.f32 %v1680, %v1860
        %v1904 = vadd.f32 %v1681, %v1862
        %v1905 = vadd.f32 %v1682, %v1865
        %v1906 = vadd.f32 %v1683, %v1867
        %v1907 = vadd.f32 %v1684, %v1870
        %v1908 = vadd.f32 %v1685, %v1872
        %v1909 = vadd.f32 %v1686, %v1875
        %v1910 = vadd.f32 %v1687, %v1877
        %v1911 = vld [vmem:[%s1688 + $0x1] sm:$0xff]
        %v1912 = vld [vmem:[%s1688 + $0x9] sm:$0xff]
        %v1913 = vld [vmem:[%s1688 + $0x19] sm:$0xff]
        %v1914 = vld [vmem:[%s1688 + $0x21] sm:$0xff]
        %v1915 = vld [vmem:[%s1688 + $0x31] sm:$0xff]
        %v1916 = vld [vmem:[%s1688 + $0x39] sm:$0xff]
        %v1917 = vld [vmem:[%s1688 + $0x49] sm:$0xff]
        %v1918 = vld [vmem:[%s1688 + $0x51] sm:$0xff]
        %v1919 = vld [vmem:[%s1688 + $0x61] sm:$0xff]
        %v1920 = vld [vmem:[%s1688 + $0x69] sm:$0xff]
        %v1921 = vld [vmem:[%s1688 + $0x79] sm:$0xff]
        %v1922 = vld [vmem:[%s1688 + $0x81] sm:$0xff]
        %v1923 = vld [vmem:[%s1688 + $0x91] sm:$0xff]
        %v1924 = vld [vmem:[%s1688 + $0x99] sm:$0xff]
        %v1925 = vld [vmem:[%s1688 + $0xa9] sm:$0xff]
        %v1926 = vld [vmem:[%s1688 + $0xb1] sm:$0xff]
        %v1927 = vld [vmem:[%s1688 + $0xc1] sm:$0xff]
        %v1928 = vld [vmem:[%s1688 + $0xc9] sm:$0xff]
        %v1929 = vld [vmem:[%s1688 + $0xd9] sm:$0xff]
        %v1930 = vld [vmem:[%s1688 + $0xe1] sm:$0xff]
        %v1931 = vld [vmem:[%s1688 + $0xf1] sm:$0xff]
        %v1932 = vld [vmem:[%s1688 + $0xf9] sm:$0xff]
        %v1933 = vld [vmem:[%s1688 + $0x109] sm:$0xff]
        %v1934 = vld [vmem:[%s1688 + $0x111] sm:$0xff]
        %v1935 = vld [vmem:[%s1688 + $0x121] sm:$0xff]
        %v1936 = vld [vmem:[%s1688 + $0x129] sm:$0xff]
        %v1937 = vld [vmem:[%s1688 + $0x139] sm:$0xff]
        %v1938 = vld [vmem:[%s1688 + $0x141] sm:$0xff]
        %v1939 = vld [vmem:[%s1688 + $0x151] sm:$0xff]
        %v1940 = vld [vmem:[%s1688 + $0x159] sm:$0xff]
        %v1941 = vld [vmem:[%s1688 + $0x169] sm:$0xff]
        %v1942 = vld [vmem:[%s1688 + $0x171] sm:$0xff]
        %v1943 = vpack.c.bf16 %v1912, %v1911
        %v1944 = vpack.c.bf16 %v1914, %v1913
        %v1945 = vpack.c.bf16 %v1916, %v1915
        %v1946 = vpack.c.bf16 %v1918, %v1917
        %v1947 = vpack.c.bf16 %v1920, %v1919
        %v1948 = vpack.c.bf16 %v1922, %v1921
        %v1949 = vpack.c.bf16 %v1924, %v1923
        %v1950 = vpack.c.bf16 %v1926, %v1925
        %v1951 = vpack.c.bf16 %v1928, %v1927
        %v1952 = vpack.c.bf16 %v1930, %v1929
        %v1953 = vpack.c.bf16 %v1932, %v1931
        %v1954 = vpack.c.bf16 %v1934, %v1933
        %v1955 = vpack.c.bf16 %v1936, %v1935
        %v1956 = vpack.c.bf16 %v1938, %v1937
        %v1957 = vpack.c.bf16 %v1940, %v1939
        %v1958 = vpack.c.bf16 %v1942, %v1941
        %s1959 = scalar_lea.vmem %s3, 14
        %v1960 = vld [vmem:[%s1959] sm:$0x3]
        %v1962 = vsel %vm331, %v1943, 0
        %v1965 = vsel %vm331, %v1944, 0
        %v1968 = vsel %vm331, %v1945, 0
        %v1971 = vsel %vm331, %v1946, 0
        %v1974 = vsel %vm331, %v1947, 0
        %v1977 = vsel %vm331, %v1948, 0
        %v1980 = vsel %vm331, %v1949, 0
        %v1983 = vsel %vm331, %v1950, 0
        %v1986 = vsel %vm331, %v1951, 0
        %v1989 = vsel %vm331, %v1952, 0
        %v1992 = vsel %vm331, %v1953, 0
        %v1995 = vsel %vm331, %v1954, 0
        %v1998 = vsel %vm331, %v1955, 0
        %v2001 = vsel %vm331, %v1956, 0
        %v2004 = vsel %vm331, %v1957, 0
        %v2007 = vsel %vm331, %v1958, 0
        %v2010 = vsel %vm567, %v1960, 0
        %2012 = vmatpush.bf16.msra.mxu0 0
        %2013 = vmatpush.bf16.msra.mxu0 0
        %2014 = vmatpush.bf16.msra.mxu0 0
        %2015 = vmatpush.bf16.msra.mxu0 0
        %2016 = vmatpush.bf16.msra.mxu0 0
        %2017 = vmatpush.bf16.msra.mxu0 0
        %2018 = vmatpush.bf16.msra.mxu0 0
        %2019 = vmatpush.bf16.msra.mxu0 %v2010
        %2020 = vmatmul.bf16.gmra.mxu0 %v1962
        %v2021 = vpop.f32.mrf.mxu0
        %v2022 = vadd.f32 0.0, %v2021
        %v2023 = vpop.f32.mrf.mxu0
        %v2024 = vadd.f32 0.0, %v2023
        %2025 = vmatmul.bf16.gmra.mxu0 %v1965
        %v2026 = vpop.f32.mrf.mxu0
        %v2027 = vadd.f32 0.0, %v2026
        %v2028 = vpop.f32.mrf.mxu0
        %v2029 = vadd.f32 0.0, %v2028
        %2030 = vmatmul.bf16.gmra.mxu0 %v1968
        %v2031 = vpop.f32.mrf.mxu0
        %v2032 = vadd.f32 0.0, %v2031
        %v2033 = vpop.f32.mrf.mxu0
        %v2034 = vadd.f32 0.0, %v2033
        %2035 = vmatmul.bf16.gmra.mxu0 %v1971
        %v2036 = vpop.f32.mrf.mxu0
        %v2037 = vadd.f32 0.0, %v2036
        %v2038 = vpop.f32.mrf.mxu0
        %v2039 = vadd.f32 0.0, %v2038
        %2040 = vmatmul.bf16.gmra.mxu0 %v1974
        %v2041 = vpop.f32.mrf.mxu0
        %v2042 = vadd.f32 0.0, %v2041
        %v2043 = vpop.f32.mrf.mxu0
        %v2044 = vadd.f32 0.0, %v2043
        %2045 = vmatmul.bf16.gmra.mxu0 %v1977
        %v2046 = vpop.f32.mrf.mxu0
        %v2047 = vadd.f32 0.0, %v2046
        %v2048 = vpop.f32.mrf.mxu0
        %v2049 = vadd.f32 0.0, %v2048
        %2050 = vmatmul.bf16.gmra.mxu0 %v1980
        %v2051 = vpop.f32.mrf.mxu0
        %v2052 = vadd.f32 0.0, %v2051
        %v2053 = vpop.f32.mrf.mxu0
        %v2054 = vadd.f32 0.0, %v2053
        %2055 = vmatmul.bf16.gmra.mxu0 %v1983
        %v2056 = vpop.f32.mrf.mxu0
        %v2057 = vadd.f32 0.0, %v2056
        %v2058 = vpop.f32.mrf.mxu0
        %v2059 = vadd.f32 0.0, %v2058
        %2060 = vmatmul.bf16.gmra.mxu0 %v1986
        %v2061 = vpop.f32.mrf.mxu0
        %v2062 = vadd.f32 0.0, %v2061
        %v2063 = vpop.f32.mrf.mxu0
        %v2064 = vadd.f32 0.0, %v2063
        %2065 = vmatmul.bf16.gmra.mxu0 %v1989
        %v2066 = vpop.f32.mrf.mxu0
        %v2067 = vadd.f32 0.0, %v2066
        %v2068 = vpop.f32.mrf.mxu0
        %v2069 = vadd.f32 0.0, %v2068
        %2070 = vmatmul.bf16.gmra.mxu0 %v1992
        %v2071 = vpop.f32.mrf.mxu0
        %v2072 = vadd.f32 0.0, %v2071
        %v2073 = vpop.f32.mrf.mxu0
        %v2074 = vadd.f32 0.0, %v2073
        %2075 = vmatmul.bf16.gmra.mxu0 %v1995
        %v2076 = vpop.f32.mrf.mxu0
        %v2077 = vadd.f32 0.0, %v2076
        %v2078 = vpop.f32.mrf.mxu0
        %v2079 = vadd.f32 0.0, %v2078
        %2080 = vmatmul.bf16.gmra.mxu0 %v1998
        %v2081 = vpop.f32.mrf.mxu0
        %v2082 = vadd.f32 0.0, %v2081
        %v2083 = vpop.f32.mrf.mxu0
        %v2084 = vadd.f32 0.0, %v2083
        %2085 = vmatmul.bf16.gmra.mxu0 %v2001
        %v2086 = vpop.f32.mrf.mxu0
        %v2087 = vadd.f32 0.0, %v2086
        %v2088 = vpop.f32.mrf.mxu0
        %v2089 = vadd.f32 0.0, %v2088
        %2090 = vmatmul.bf16.gmra.mxu0 %v2004
        %v2091 = vpop.f32.mrf.mxu0
        %v2092 = vadd.f32 0.0, %v2091
        %v2093 = vpop.f32.mrf.mxu0
        %v2094 = vadd.f32 0.0, %v2093
        %2095 = vmatmul.bf16.gmra.mxu0 %v2007
        %v2096 = vpop.f32.mrf.mxu0
        %v2097 = vadd.f32 0.0, %v2096
        %v2098 = vpop.f32.mrf.mxu0
        %v2099 = vadd.f32 0.0, %v2098
        %2100 = vdwg.mxu0
        %v2101 = vadd.f32 %v1879, %v2022
        %v2102 = vadd.f32 %v1880, %v2024
        %v2103 = vadd.f32 %v1881, %v2027
        %v2104 = vadd.f32 %v1882, %v2029
        %v2105 = vadd.f32 %v1883, %v2032
        %v2106 = vadd.f32 %v1884, %v2034
        %v2107 = vadd.f32 %v1885, %v2037
        %v2108 = vadd.f32 %v1886, %v2039
        %v2109 = vadd.f32 %v1887, %v2042
        %v2110 = vadd.f32 %v1888, %v2044
        %v2111 = vadd.f32 %v1889, %v2047
        %v2112 = vadd.f32 %v1890, %v2049
        %v2113 = vadd.f32 %v1891, %v2052
        %v2114 = vadd.f32 %v1892, %v2054
        %v2115 = vadd.f32 %v1893, %v2057
        %v2116 = vadd.f32 %v1894, %v2059
        %v2117 = vadd.f32 %v1895, %v2062
        %v2118 = vadd.f32 %v1896, %v2064
        %v2119 = vadd.f32 %v1897, %v2067
        %v2120 = vadd.f32 %v1898, %v2069
        %v2121 = vadd.f32 %v1899, %v2072
        %v2122 = vadd.f32 %v1900, %v2074
        %v2123 = vadd.f32 %v1901, %v2077
        %v2124 = vadd.f32 %v1902, %v2079
        %v2125 = vadd.f32 %v1903, %v2082
        %v2126 = vadd.f32 %v1904, %v2084
        %v2127 = vadd.f32 %v1905, %v2087
        %v2128 = vadd.f32 %v1906, %v2089
        %v2129 = vadd.f32 %v1907, %v2092
        %v2130 = vadd.f32 %v1908, %v2094
        %v2131 = vadd.f32 %v1909, %v2097
        %v2132 = vadd.f32 %v1910, %v2099
        %v2133 = vld [vmem:[%s1688 + $0x2] sm:$0xff]
        %v2134 = vld [vmem:[%s1688 + $0xa] sm:$0xff]
        %v2135 = vld [vmem:[%s1688 + $0x1a] sm:$0xff]
        %v2136 = vld [vmem:[%s1688 + $0x22] sm:$0xff]
        %v2137 = vld [vmem:[%s1688 + $0x32] sm:$0xff]
        %v2138 = vld [vmem:[%s1688 + $0x3a] sm:$0xff]
        %v2139 = vld [vmem:[%s1688 + $0x4a] sm:$0xff]
        %v2140 = vld [vmem:[%s1688 + $0x52] sm:$0xff]
        %v2141 = vld [vmem:[%s1688 + $0x62] sm:$0xff]
        %v2142 = vld [vmem:[%s1688 + $0x6a] sm:$0xff]
        %v2143 = vld [vmem:[%s1688 + $0x7a] sm:$0xff]
        %v2144 = vld [vmem:[%s1688 + $0x82] sm:$0xff]
        %v2145 = vld [vmem:[%s1688 + $0x92] sm:$0xff]
        %v2146 = vld [vmem:[%s1688 + $0x9a] sm:$0xff]
        %v2147 = vld [vmem:[%s1688 + $0xaa] sm:$0xff]
        %v2148 = vld [vmem:[%s1688 + $0xb2] sm:$0xff]
        %v2149 = vld [vmem:[%s1688 + $0xc2] sm:$0xff]
        %v2150 = vld [vmem:[%s1688 + $0xca] sm:$0xff]
        %v2151 = vld [vmem:[%s1688 + $0xda] sm:$0xff]
        %v2152 = vld [vmem:[%s1688 + $0xe2] sm:$0xff]
        %v2153 = vld [vmem:[%s1688 + $0xf2] sm:$0xff]
        %v2154 = vld [vmem:[%s1688 + $0xfa] sm:$0xff]
        %v2155 = vld [vmem:[%s1688 + $0x10a] sm:$0xff]
        %v2156 = vld [vmem:[%s1688 + $0x112] sm:$0xff]
        %v2157 = vld [vmem:[%s1688 + $0x122] sm:$0xff]
        %v2158 = vld [vmem:[%s1688 + $0x12a] sm:$0xff]
        %v2159 = vld [vmem:[%s1688 + $0x13a] sm:$0xff]
        %v2160 = vld [vmem:[%s1688 + $0x142] sm:$0xff]
        %v2161 = vld [vmem:[%s1688 + $0x152] sm:$0xff]
        %v2162 = vld [vmem:[%s1688 + $0x15a] sm:$0xff]
        %v2163 = vld [vmem:[%s1688 + $0x16a] sm:$0xff]
        %v2164 = vld [vmem:[%s1688 + $0x172] sm:$0xff]
        %v2165 = vpack.c.bf16 %v2134, %v2133
        %v2166 = vpack.c.bf16 %v2136, %v2135
        %v2167 = vpack.c.bf16 %v2138, %v2137
        %v2168 = vpack.c.bf16 %v2140, %v2139
        %v2169 = vpack.c.bf16 %v2142, %v2141
        %v2170 = vpack.c.bf16 %v2144, %v2143
        %v2171 = vpack.c.bf16 %v2146, %v2145
        %v2172 = vpack.c.bf16 %v2148, %v2147
        %v2173 = vpack.c.bf16 %v2150, %v2149
        %v2174 = vpack.c.bf16 %v2152, %v2151
        %v2175 = vpack.c.bf16 %v2154, %v2153
        %v2176 = vpack.c.bf16 %v2156, %v2155
        %v2177 = vpack.c.bf16 %v2158, %v2157
        %v2178 = vpack.c.bf16 %v2160, %v2159
        %v2179 = vpack.c.bf16 %v2162, %v2161
        %v2180 = vpack.c.bf16 %v2164, %v2163
        %s2181 = scalar_lea.vmem %s3, 16
        %v2182 = vld [vmem:[%s2181] sm:$0x3]
        %v2184 = vsel %vm331, %v2165, 0
        %v2187 = vsel %vm331, %v2166, 0
        %v2190 = vsel %vm331, %v2167, 0
        %v2193 = vsel %vm331, %v2168, 0
        %v2196 = vsel %vm331, %v2169, 0
        %v2199 = vsel %vm331, %v2170, 0
        %v2202 = vsel %vm331, %v2171, 0
        %v2205 = vsel %vm331, %v2172, 0
        %v2208 = vsel %vm331, %v2173, 0
        %v2211 = vsel %vm331, %v2174, 0
        %v2214 = vsel %vm331, %v2175, 0
        %v2217 = vsel %vm331, %v2176, 0
        %v2220 = vsel %vm331, %v2177, 0
        %v2223 = vsel %vm331, %v2178, 0
        %v2226 = vsel %vm331, %v2179, 0
        %v2229 = vsel %vm331, %v2180, 0
        %v2232 = vsel %vm567, %v2182, 0
        %2234 = vmatpush.bf16.msra.mxu0 0
        %2235 = vmatpush.bf16.msra.mxu0 0
        %2236 = vmatpush.bf16.msra.mxu0 0
        %2237 = vmatpush.bf16.msra.mxu0 0
        %2238 = vmatpush.bf16.msra.mxu0 0
        %2239 = vmatpush.bf16.msra.mxu0 0
        %2240 = vmatpush.bf16.msra.mxu0 0
        %2241 = vmatpush.bf16.msra.mxu0 %v2232
        %2242 = vmatmul.bf16.gmra.mxu0 %v2184
        %v2243 = vpop.f32.mrf.mxu0
        %v2244 = vadd.f32 0.0, %v2243
        %v2245 = vpop.f32.mrf.mxu0
        %v2246 = vadd.f32 0.0, %v2245
        %2247 = vmatmul.bf16.gmra.mxu0 %v2187
        %v2248 = vpop.f32.mrf.mxu0
        %v2249 = vadd.f32 0.0, %v2248
        %v2250 = vpop.f32.mrf.mxu0
        %v2251 = vadd.f32 0.0, %v2250
        %2252 = vmatmul.bf16.gmra.mxu0 %v2190
        %v2253 = vpop.f32.mrf.mxu0
        %v2254 = vadd.f32 0.0, %v2253
        %v2255 = vpop.f32.mrf.mxu0
        %v2256 = vadd.f32 0.0, %v2255
        %2257 = vmatmul.bf16.gmra.mxu0 %v2193
        %v2258 = vpop.f32.mrf.mxu0
        %v2259 = vadd.f32 0.0, %v2258
        %v2260 = vpop.f32.mrf.mxu0
        %v2261 = vadd.f32 0.0, %v2260
        %2262 = vmatmul.bf16.gmra.mxu0 %v2196
        %v2263 = vpop.f32.mrf.mxu0
        %v2264 = vadd.f32 0.0, %v2263
        %v2265 = vpop.f32.mrf.mxu0
        %v2266 = vadd.f32 0.0, %v2265
        %2267 = vmatmul.bf16.gmra.mxu0 %v2199
        %v2268 = vpop.f32.mrf.mxu0
        %v2269 = vadd.f32 0.0, %v2268
        %v2270 = vpop.f32.mrf.mxu0
        %v2271 = vadd.f32 0.0, %v2270
        %2272 = vmatmul.bf16.gmra.mxu0 %v2202
        %v2273 = vpop.f32.mrf.mxu0
        %v2274 = vadd.f32 0.0, %v2273
        %v2275 = vpop.f32.mrf.mxu0
        %v2276 = vadd.f32 0.0, %v2275
        %2277 = vmatmul.bf16.gmra.mxu0 %v2205
        %v2278 = vpop.f32.mrf.mxu0
        %v2279 = vadd.f32 0.0, %v2278
        %v2280 = vpop.f32.mrf.mxu0
        %v2281 = vadd.f32 0.0, %v2280
        %2282 = vmatmul.bf16.gmra.mxu0 %v2208
        %v2283 = vpop.f32.mrf.mxu0
        %v2284 = vadd.f32 0.0, %v2283
        %v2285 = vpop.f32.mrf.mxu0
        %v2286 = vadd.f32 0.0, %v2285
        %2287 = vmatmul.bf16.gmra.mxu0 %v2211
        %v2288 = vpop.f32.mrf.mxu0
        %v2289 = vadd.f32 0.0, %v2288
        %v2290 = vpop.f32.mrf.mxu0
        %v2291 = vadd.f32 0.0, %v2290
        %2292 = vmatmul.bf16.gmra.mxu0 %v2214
        %v2293 = vpop.f32.mrf.mxu0
        %v2294 = vadd.f32 0.0, %v2293
        %v2295 = vpop.f32.mrf.mxu0
        %v2296 = vadd.f32 0.0, %v2295
        %2297 = vmatmul.bf16.gmra.mxu0 %v2217
        %v2298 = vpop.f32.mrf.mxu0
        %v2299 = vadd.f32 0.0, %v2298
        %v2300 = vpop.f32.mrf.mxu0
        %v2301 = vadd.f32 0.0, %v2300
        %2302 = vmatmul.bf16.gmra.mxu0 %v2220
        %v2303 = vpop.f32.mrf.mxu0
        %v2304 = vadd.f32 0.0, %v2303
        %v2305 = vpop.f32.mrf.mxu0
        %v2306 = vadd.f32 0.0, %v2305
        %2307 = vmatmul.bf16.gmra.mxu0 %v2223
        %v2308 = vpop.f32.mrf.mxu0
        %v2309 = vadd.f32 0.0, %v2308
        %v2310 = vpop.f32.mrf.mxu0
        %v2311 = vadd.f32 0.0, %v2310
        %2312 = vmatmul.bf16.gmra.mxu0 %v2226
        %v2313 = vpop.f32.mrf.mxu0
        %v2314 = vadd.f32 0.0, %v2313
        %v2315 = vpop.f32.mrf.mxu0
        %v2316 = vadd.f32 0.0, %v2315
        %2317 = vmatmul.bf16.gmra.mxu0 %v2229
        %v2318 = vpop.f32.mrf.mxu0
        %v2319 = vadd.f32 0.0, %v2318
        %v2320 = vpop.f32.mrf.mxu0
        %v2321 = vadd.f32 0.0, %v2320
        %2322 = vdwg.mxu0
        %v2323 = vadd.f32 %v2101, %v2244
        %v2324 = vadd.f32 %v2102, %v2246
        %v2325 = vadd.f32 %v2103, %v2249
        %v2326 = vadd.f32 %v2104, %v2251
        %v2327 = vadd.f32 %v2105, %v2254
        %v2328 = vadd.f32 %v2106, %v2256
        %v2329 = vadd.f32 %v2107, %v2259
        %v2330 = vadd.f32 %v2108, %v2261
        %v2331 = vadd.f32 %v2109, %v2264
        %v2332 = vadd.f32 %v2110, %v2266
        %v2333 = vadd.f32 %v2111, %v2269
        %v2334 = vadd.f32 %v2112, %v2271
        %v2335 = vadd.f32 %v2113, %v2274
        %v2336 = vadd.f32 %v2114, %v2276
        %v2337 = vadd.f32 %v2115, %v2279
        %v2338 = vadd.f32 %v2116, %v2281
        %v2339 = vadd.f32 %v2117, %v2284
        %v2340 = vadd.f32 %v2118, %v2286
        %v2341 = vadd.f32 %v2119, %v2289
        %v2342 = vadd.f32 %v2120, %v2291
        %v2343 = vadd.f32 %v2121, %v2294
        %v2344 = vadd.f32 %v2122, %v2296
        %v2345 = vadd.f32 %v2123, %v2299
        %v2346 = vadd.f32 %v2124, %v2301
        %v2347 = vadd.f32 %v2125, %v2304
        %v2348 = vadd.f32 %v2126, %v2306
        %v2349 = vadd.f32 %v2127, %v2309
        %v2350 = vadd.f32 %v2128, %v2311
        %v2351 = vadd.f32 %v2129, %v2314
        %v2352 = vadd.f32 %v2130, %v2316
        %v2353 = vadd.f32 %v2131, %v2319
        %v2354 = vadd.f32 %v2132, %v2321
        %v2355 = vld [vmem:[%s4] sm:$0x1]
        %v2357 = vperm.slane %v2355, 0
        %v2359 = vadd.f32 %v2323, %v2357
        %v2360 = vadd.f32 %v2324, %v2357
        %v2361 = vadd.f32 %v2325, %v2357
        %v2362 = vadd.f32 %v2326, %v2357
        %v2363 = vadd.f32 %v2327, %v2357
        %v2364 = vadd.f32 %v2328, %v2357
        %v2365 = vadd.f32 %v2329, %v2357
        %v2366 = vadd.f32 %v2330, %v2357
        %v2367 = vadd.f32 %v2331, %v2357
        %v2368 = vadd.f32 %v2332, %v2357
        %v2369 = vadd.f32 %v2333, %v2357
        %v2370 = vadd.f32 %v2334, %v2357
        %v2371 = vadd.f32 %v2335, %v2357
        %v2372 = vadd.f32 %v2336, %v2357
        %v2373 = vadd.f32 %v2337, %v2357
        %v2374 = vadd.f32 %v2338, %v2357
        %v2375 = vadd.f32 %v2339, %v2357
        %v2376 = vadd.f32 %v2340, %v2357
        %v2377 = vadd.f32 %v2341, %v2357
        %v2378 = vadd.f32 %v2342, %v2357
        %v2379 = vadd.f32 %v2343, %v2357
        %v2380 = vadd.f32 %v2344, %v2357
        %v2381 = vadd.f32 %v2345, %v2357
        %v2382 = vadd.f32 %v2346, %v2357
        %v2383 = vadd.f32 %v2347, %v2357
        %v2384 = vadd.f32 %v2348, %v2357
        %v2385 = vadd.f32 %v2349, %v2357
        %v2386 = vadd.f32 %v2350, %v2357
        %v2387 = vadd.f32 %v2351, %v2357
        %v2388 = vadd.f32 %v2352, %v2357
        %v2389 = vadd.f32 %v2353, %v2357
        %v2390 = vadd.f32 %v2354, %v2357
        %vm2391 = vcmask 64512
        %2392 = vst.msk [vmem:[%s297] sm:$0xff] %vm2391, %v2359
        %2393 = vst.msk [vmem:[%s297 + $0x8] sm:$0xff] %vm2391, %v2360
        %2394 = vst.msk [vmem:[%s297 + $0x10] sm:$0xff] %vm2391, %v2361
        %2395 = vst.msk [vmem:[%s297 + $0x18] sm:$0xff] %vm2391, %v2362
        %2396 = vst.msk [vmem:[%s297 + $0x20] sm:$0xff] %vm2391, %v2363
        %2397 = vst.msk [vmem:[%s297 + $0x28] sm:$0xff] %vm2391, %v2364
        %2398 = vst.msk [vmem:[%s297 + $0x30] sm:$0xff] %vm2391, %v2365
        %2399 = vst.msk [vmem:[%s297 + $0x38] sm:$0xff] %vm2391, %v2366
        %2400 = vst.msk [vmem:[%s297 + $0x40] sm:$0xff] %vm2391, %v2367
        %2401 = vst.msk [vmem:[%s297 + $0x48] sm:$0xff] %vm2391, %v2368
        %2402 = vst.msk [vmem:[%s297 + $0x50] sm:$0xff] %vm2391, %v2369
        %2403 = vst.msk [vmem:[%s297 + $0x58] sm:$0xff] %vm2391, %v2370
        %2404 = vst.msk [vmem:[%s297 + $0x60] sm:$0xff] %vm2391, %v2371
        %2405 = vst.msk [vmem:[%s297 + $0x68] sm:$0xff] %vm2391, %v2372
        %2406 = vst.msk [vmem:[%s297 + $0x70] sm:$0xff] %vm2391, %v2373
        %2407 = vst.msk [vmem:[%s297 + $0x78] sm:$0xff] %vm2391, %v2374
        %2408 = vst.msk [vmem:[%s297 + $0x80] sm:$0xff] %vm2391, %v2375
        %2409 = vst.msk [vmem:[%s297 + $0x88] sm:$0xff] %vm2391, %v2376
        %2410 = vst.msk [vmem:[%s297 + $0x90] sm:$0xff] %vm2391, %v2377
        %2411 = vst.msk [vmem:[%s297 + $0x98] sm:$0xff] %vm2391, %v2378
        %2412 = vst.msk [vmem:[%s297 + $0xa0] sm:$0xff] %vm2391, %v2379
        %2413 = vst.msk [vmem:[%s297 + $0xa8] sm:$0xff] %vm2391, %v2380
        %2414 = vst.msk [vmem:[%s297 + $0xb0] sm:$0xff] %vm2391, %v2381
        %2415 = vst.msk [vmem:[%s297 + $0xb8] sm:$0xff] %vm2391, %v2382
        %2416 = vst.msk [vmem:[%s297 + $0xc0] sm:$0xff] %vm2391, %v2383
        %2417 = vst.msk [vmem:[%s297 + $0xc8] sm:$0xff] %vm2391, %v2384
        %2418 = vst.msk [vmem:[%s297 + $0xd0] sm:$0xff] %vm2391, %v2385
        %2419 = vst.msk [vmem:[%s297 + $0xd8] sm:$0xff] %vm2391, %v2386
        %2420 = vst.msk [vmem:[%s297 + $0xe0] sm:$0xff] %vm2391, %v2387
        %2421 = vst.msk [vmem:[%s297 + $0xe8] sm:$0xff] %vm2391, %v2388
        %2422 = vst.msk [vmem:[%s297 + $0xf0] sm:$0xff] %vm2391, %v2389
        %2423 = vst.msk [vmem:[%s297 + $0xf8] sm:$0xff] %vm2391, %v2390
        %v2424 = vsel %vm2391, %v2359, 0.0
        %v2425 = vsel %vm2391, %v2360, 0.0
        %v2426 = vadd.f32 %v2424, %v2425
        %v2427 = vsel %vm2391, %v2361, 0.0
        %v2428 = vadd.f32 %v2426, %v2427
        %v2429 = vsel %vm2391, %v2362, 0.0
        %v2430 = vadd.f32 %v2428, %v2429
        %v2431 = vsel %vm2391, %v2363, 0.0
        %v2432 = vadd.f32 %v2430, %v2431
        %v2433 = vsel %vm2391, %v2364, 0.0
        %v2434 = vadd.f32 %v2432, %v2433
        %v2435 = vsel %vm2391, %v2365, 0.0
        %v2436 = vadd.f32 %v2434, %v2435
        %v2437 = vsel %vm2391, %v2366, 0.0
        %v2438 = vadd.f32 %v2436, %v2437
        %v2439 = vsel %vm2391, %v2367, 0.0
        %v2440 = vadd.f32 %v2438, %v2439
        %v2441 = vsel %vm2391, %v2368, 0.0
        %v2442 = vadd.f32 %v2440, %v2441
        %v2443 = vsel %vm2391, %v2369, 0.0
        %v2444 = vadd.f32 %v2442, %v2443
        %v2445 = vsel %vm2391, %v2370, 0.0
        %v2446 = vadd.f32 %v2444, %v2445
        %v2447 = vsel %vm2391, %v2371, 0.0
        %v2448 = vadd.f32 %v2446, %v2447
        %v2449 = vsel %vm2391, %v2372, 0.0
        %v2450 = vadd.f32 %v2448, %v2449
        %v2451 = vsel %vm2391, %v2373, 0.0
        %v2452 = vadd.f32 %v2450, %v2451
        %v2453 = vsel %vm2391, %v2374, 0.0
        %v2454 = vadd.f32 %v2452, %v2453
        %v2455 = vsel %vm2391, %v2375, 0.0
        %v2456 = vadd.f32 %v2454, %v2455
        %v2457 = vsel %vm2391, %v2376, 0.0
        %v2458 = vadd.f32 %v2456, %v2457
        %v2459 = vsel %vm2391, %v2377, 0.0
        %v2460 = vadd.f32 %v2458, %v2459
        %v2461 = vsel %vm2391, %v2378, 0.0
        %v2462 = vadd.f32 %v2460, %v2461
        %v2463 = vsel %vm2391, %v2379, 0.0
        %v2464 = vadd.f32 %v2462, %v2463
        %v2465 = vsel %vm2391, %v2380, 0.0
        %v2466 = vadd.f32 %v2464, %v2465
        %v2467 = vsel %vm2391, %v2381, 0.0
        %v2468 = vadd.f32 %v2466, %v2467
        %v2469 = vsel %vm2391, %v2382, 0.0
        %v2470 = vadd.f32 %v2468, %v2469
        %v2471 = vsel %vm2391, %v2383, 0.0
        %v2472 = vadd.f32 %v2470, %v2471
        %v2473 = vsel %vm2391, %v2384, 0.0
        %v2474 = vadd.f32 %v2472, %v2473
        %v2475 = vsel %vm2391, %v2385, 0.0
        %v2476 = vadd.f32 %v2474, %v2475
        %v2477 = vsel %vm2391, %v2386, 0.0
        %v2478 = vadd.f32 %v2476, %v2477
        %v2479 = vsel %vm2391, %v2387, 0.0
        %v2480 = vadd.f32 %v2478, %v2479
        %v2481 = vsel %vm2391, %v2388, 0.0
        %v2482 = vadd.f32 %v2480, %v2481
        %v2483 = vsel %vm2391, %v2389, 0.0
        %v2484 = vadd.f32 %v2482, %v2483
        %v2485 = vsel %vm2391, %v2390, 0.0
        %v2486 = vadd.f32 %v2484, %v2485
        %v2487 = vrot.slane %v2486, 4
        %v2488 = vadd.f32 %v2486, %v2487
        %v2489 = vrot.slane %v2488, 2
        %v2490 = vadd.f32 %v2488, %v2489
        %v2491 = vrot.slane %v2490, 1
        %v2492 = vadd.f32 %v2490, %v2491
        %vm2493 = vcmask 57344
        %2494 = vst.msk [vmem:[%s281] sm:$0x1] %vm2493, %v2492
        %v2495 = vmul.f32 %v2359, %v2359
        %v2496 = vmul.f32 %v2360, %v2360
        %v2497 = vmul.f32 %v2361, %v2361
        %v2498 = vmul.f32 %v2362, %v2362
        %v2499 = vmul.f32 %v2363, %v2363
        %v2500 = vmul.f32 %v2364, %v2364
        %v2501 = vmul.f32 %v2365, %v2365
        %v2502 = vmul.f32 %v2366, %v2366
        %v2503 = vmul.f32 %v2367, %v2367
        %v2504 = vmul.f32 %v2368, %v2368
        %v2505 = vmul.f32 %v2369, %v2369
        %v2506 = vmul.f32 %v2370, %v2370
        %v2507 = vmul.f32 %v2371, %v2371
        %v2508 = vmul.f32 %v2372, %v2372
        %v2509 = vmul.f32 %v2373, %v2373
        %v2510 = vmul.f32 %v2374, %v2374
        %v2511 = vmul.f32 %v2375, %v2375
        %v2512 = vmul.f32 %v2376, %v2376
        %v2513 = vmul.f32 %v2377, %v2377
        %v2514 = vmul.f32 %v2378, %v2378
        %v2515 = vmul.f32 %v2379, %v2379
        %v2516 = vmul.f32 %v2380, %v2380
        %v2517 = vmul.f32 %v2381, %v2381
        %v2518 = vmul.f32 %v2382, %v2382
        %v2519 = vmul.f32 %v2383, %v2383
        %v2520 = vmul.f32 %v2384, %v2384
        %v2521 = vmul.f32 %v2385, %v2385
        %v2522 = vmul.f32 %v2386, %v2386
        %v2523 = vmul.f32 %v2387, %v2387
        %v2524 = vmul.f32 %v2388, %v2388
        %v2525 = vmul.f32 %v2389, %v2389
        %v2526 = vmul.f32 %v2390, %v2390
        %v2527 = vsel %vm2391, %v2495, 0.0
        %v2528 = vsel %vm2391, %v2496, 0.0
        %v2529 = vadd.f32 %v2527, %v2528
        %v2530 = vsel %vm2391, %v2497, 0.0
        %v2531 = vadd.f32 %v2529, %v2530
        %v2532 = vsel %vm2391, %v2498, 0.0
        %v2533 = vadd.f32 %v2531, %v2532
        %v2534 = vsel %vm2391, %v2499, 0.0
        %v2535 = vadd.f32 %v2533, %v2534
        %v2536 = vsel %vm2391, %v2500, 0.0
        %v2537 = vadd.f32 %v2535, %v2536
        %v2538 = vsel %vm2391, %v2501, 0.0
        %v2539 = vadd.f32 %v2537, %v2538
        %v2540 = vsel %vm2391, %v2502, 0.0
        %v2541 = vadd.f32 %v2539, %v2540
        %v2542 = vsel %vm2391, %v2503, 0.0
        %v2543 = vadd.f32 %v2541, %v2542
        %v2544 = vsel %vm2391, %v2504, 0.0
        %v2545 = vadd.f32 %v2543, %v2544
        %v2546 = vsel %vm2391, %v2505, 0.0
        %v2547 = vadd.f32 %v2545, %v2546
        %v2548 = vsel %vm2391, %v2506, 0.0
        %v2549 = vadd.f32 %v2547, %v2548
        %v2550 = vsel %vm2391, %v2507, 0.0
        %v2551 = vadd.f32 %v2549, %v2550
        %v2552 = vsel %vm2391, %v2508, 0.0
        %v2553 = vadd.f32 %v2551, %v2552
        %v2554 = vsel %vm2391, %v2509, 0.0
        %v2555 = vadd.f32 %v2553, %v2554
        %v2556 = vsel %vm2391, %v2510, 0.0
        %v2557 = vadd.f32 %v2555, %v2556
        %v2558 = vsel %vm2391, %v2511, 0.0
        %v2559 = vadd.f32 %v2557, %v2558
        %v2560 = vsel %vm2391, %v2512, 0.0
        %v2561 = vadd.f32 %v2559, %v2560
        %v2562 = vsel %vm2391, %v2513, 0.0
        %v2563 = vadd.f32 %v2561, %v2562
        %v2564 = vsel %vm2391, %v2514, 0.0
        %v2565 = vadd.f32 %v2563, %v2564
        %v2566 = vsel %vm2391, %v2515, 0.0
        %v2567 = vadd.f32 %v2565, %v2566
        %v2568 = vsel %vm2391, %v2516, 0.0
        %v2569 = vadd.f32 %v2567, %v2568
        %v2570 = vsel %vm2391, %v2517, 0.0
        %v2571 = vadd.f32 %v2569, %v2570
        %v2572 = vsel %vm2391, %v2518, 0.0
        %v2573 = vadd.f32 %v2571, %v2572
        %v2574 = vsel %vm2391, %v2519, 0.0
        %v2575 = vadd.f32 %v2573, %v2574
        %v2576 = vsel %vm2391, %v2520, 0.0
        %v2577 = vadd.f32 %v2575, %v2576
        %v2578 = vsel %vm2391, %v2521, 0.0
        %v2579 = vadd.f32 %v2577, %v2578
        %v2580 = vsel %vm2391, %v2522, 0.0
        %v2581 = vadd.f32 %v2579, %v2580
        %v2582 = vsel %vm2391, %v2523, 0.0
        %v2583 = vadd.f32 %v2581, %v2582
        %v2584 = vsel %vm2391, %v2524, 0.0
        %v2585 = vadd.f32 %v2583, %v2584
        %v2586 = vsel %vm2391, %v2525, 0.0
        %v2587 = vadd.f32 %v2585, %v2586
        %v2588 = vsel %vm2391, %v2526, 0.0
        %v2589 = vadd.f32 %v2587, %v2588
        %v2590 = vrot.slane %v2589, 4
        %v2591 = vadd.f32 %v2589, %v2590
        %v2592 = vrot.slane %v2591, 2
        %v2593 = vadd.f32 %v2591, %v2592
        %v2594 = vrot.slane %v2593, 1
        %v2595 = vadd.f32 %v2593, %v2594
        %2596 = vst.msk [vmem:[%s287] sm:$0x1] %vm2493, %v2595
        %p2597 = scmp.lt.s32.totalorder %s25, 1
        %s2598 = scalar_select %p2597, %s25, 1
        %s2599 = smul.addr %s2598, 32
        %s2600 = smul.addr %s2599, 8
        %s2601 = scalar_lea.vmem %s5, %s2600
        %s2602 = sand.u32 %s169, 1
        %s2603 = scalar_lea.sflag [#allocation4], %s2602
        %s2604 = sand.u32 %s169, 1
        %s2605 = scalar_lea.vmem [#allocation3], %s2604
        %s2606 = sand.u32 %s195, 1
        %s2607 = scalar_lea.sflag [#allocation6], %s2606
        %s2608 = sand.u32 %s195, 1
        %s2609 = scalar_lea.vmem [#allocation5], %s2608
        // Predicated region
        $region41: #{tpu_custom_call.1} parent=39 // pred_check
          %p2610 = pneg %p153
        $region42: #{tpu_custom_call.1} parent=39 // pred_check_branch
          %2612 = sbr.rel (%p2610) target = $region44
        $region43: #{tpu_custom_call.1} parent=39 // pred_region
          _
        $region44: #{tpu_custom_call.1} parent=39 // pred_fallthru
          _
        // Predicated region
        $region45: #{tpu_custom_call.1} parent=39 // pred_check
          %p2613 = pneg %p179
        $region46: #{tpu_custom_call.1} parent=39 // pred_check_branch
          %2615 = sbr.rel (%p2613) target = $region48
        $region47: #{tpu_custom_call.1} parent=39 // pred_region
          %2617 = vsyncadd %s2603, 0
          %s2618 = scalar_lea.hbm %s6, %s25
          %s2620 = sshll.u32 %s2605, 4
          %s2621 = int_to_ptr.vmem [resolvable:$true] %s2620
          %s2622 = sshll.u32 %s2618, 4
          %s2623 = int_to_ptr.hbm [resolvable:$true] %s2622
          %2625 = dma.vmem_to_hbm [thread:$0]  %s2621, 16, %s2623, %s2603
        $region48: #{tpu_custom_call.1} parent=39 // pred_fallthru
          _
        // Predicated region
        $region49: #{tpu_custom_call.1} parent=39 // pred_check
          %p2626 = pneg %p205
        $region50: #{tpu_custom_call.1} parent=39 // pred_check_branch
          %2628 = sbr.rel (%p2626) target = $region52
        $region51: #{tpu_custom_call.1} parent=39 // pred_region
          %2630 = vsyncadd %s2607, 0
          %s2631 = scalar_lea.hbm %s7, %s25
          %s2633 = sshll.u32 %s2609, 4
          %s2634 = int_to_ptr.vmem [resolvable:$true] %s2633
          %s2635 = sshll.u32 %s2631, 4
          %s2636 = int_to_ptr.hbm [resolvable:$true] %s2635
          %2638 = dma.vmem_to_hbm [thread:$0]  %s2634, 16, %s2636, %s2607
        $region52: #{tpu_custom_call.1} parent=39 // pred_fallthru
          _
      $region40: #{tpu_custom_call.1} parent=5 // pred_fallthru
        _
      %p2639 = scmp.le.s32.totalorder 2, %s20
      // Predicated region
      $region53: #{tpu_custom_call.1} parent=5 // pred_check
        %p2640 = pneg %p2639
      $region54: #{tpu_custom_call.1} parent=5 // pred_check_branch
        %2642 = sbr.rel (%p2640) target = $region56
      $region55: #{tpu_custom_call.1} parent=5 // pred_region
        %s2643 = ssub.s32 %s20, 2
        // Predicated region
        $region57: #{tpu_custom_call.1} parent=55 // pred_check
          %p2644 = pneg %p159
        $region58: #{tpu_custom_call.1} parent=55 // pred_check_branch
          %2646 = sbr.rel (%p2644) target = $region60
        $region59: #{tpu_custom_call.1} parent=55 // pred_region
          %p2647 = scmp.lt.s32.totalorder %s26, 1
          %s2648 = scalar_select %p2647, %s26, 1
          %s2649 = smul.addr %s2648, 32
          %s2650 = smul.addr %s2649, 8
          %s2651 = scalar_lea.vmem %s5, %s2650
        $region60: #{tpu_custom_call.1} parent=55 // pred_fallthru
          _
        // Predicated region
        $region61: #{tpu_custom_call.1} parent=55 // pred_check
          %p2652 = pneg %p185
        $region62: #{tpu_custom_call.1} parent=55 // pred_check_branch
          %2654 = sbr.rel (%p2652) target = $region64
        $region63: #{tpu_custom_call.1} parent=55 // pred_region
          %s2655 = sand.u32 %s170, 1
          %s2656 = scalar_lea.sflag [#allocation4], %s2655
          %s2657 = sand.u32 %s170, 1
          %s2658 = scalar_lea.vmem [#allocation3], %s2657
          %2660 = dma.done %s2656, 16
        $region64: #{tpu_custom_call.1} parent=55 // pred_fallthru
          _
        // Predicated region
        $region65: #{tpu_custom_call.1} parent=55 // pred_check
          %p2661 = pneg %p211
        $region66: #{tpu_custom_call.1} parent=55 // pred_check_branch
          %2663 = sbr.rel (%p2661) target = $region68
        $region67: #{tpu_custom_call.1} parent=55 // pred_region
          %s2664 = sand.u32 %s196, 1
          %s2665 = scalar_lea.sflag [#allocation6], %s2664
          %s2666 = sand.u32 %s196, 1
          %s2667 = scalar_lea.vmem [#allocation5], %s2666
          %2669 = dma.done %s2665, 16
        $region68: #{tpu_custom_call.1} parent=55 // pred_fallthru
          _
      $region56: #{tpu_custom_call.1} parent=5 // pred_fallthru
        _
    $region6: #{tpu_custom_call.1} parent=1 // loop_footer
      %s24 = sadd.s32 1, %s20
    $region7: #{tpu_custom_call.1} parent=1 // loop_footer_branch
      %19 = sbr.rel target = $region3
    $region8: #{tpu_custom_call.1} parent=1 // loop_exit
      _
    %2670 = vsyncpa [#allocation4], 1
    %s2671 = scalar_lea.sflag [#allocation4], 1
    %2672 = vsyncpa %s2671, 1
    %2673 = vsyncpa [#allocation6], 1
    %s2674 = scalar_lea.sflag [#allocation6], 1
    %2675 = vsyncpa %s2674, 1

</llo_original>
